<compile_context>
chip_gen: v7x
topology: tpu7x:2x2x1
jax: 0.10.0
libtpu: 0.0.40
codegen_flags: <defaults>
</compile_context>

<pallas_src>
import functools

import jax
import jax.numpy as jnp
from jax.experimental import pallas as pl
from jax.experimental.pallas import tpu as pltpu

# ----------------------------- configuration --------------------------------
FEAT_DIMS   = (256, 256, 64)     # MLP_QueryNet default feat_dims
OUT_DIM     = 4                  # MLP_QueryNet default out_dim
PT_DIM      = 3                  # pts dim (unused by the reference forward)
LEAKY_SLOPE = 0.01
LANE        = 128
TM          = 256                # rows per grid step (sweep 256-512 for prod)
MXU_DTYPE   = jnp.bfloat16       # matmul input dtype (f32 accumulation)


def _rup(x, m):
    return ((x + m - 1) // m) * m


# ====================== fused 3-layer MLP Pallas kernel ======================
def _mlp_query_kernel(x_ref, w0_ref, b0_ref, w1_ref, b1_ref, w2_ref, b2_ref,
                      o_ref, *, slope):
    # x / weights are bf16; every dot accumulates in f32 on the MXU.
    x = x_ref[...]
    h = jnp.dot(x, w0_ref[...], preferred_element_type=jnp.float32) + b0_ref[...]
    h = jnp.maximum(h, h * slope)                      # LeakyReLU in f32 (VPU)
    h = jnp.dot(h.astype(MXU_DTYPE), w1_ref[...],
                preferred_element_type=jnp.float32) + b1_ref[...]
    h = jnp.maximum(h, h * slope)
    o = jnp.dot(h.astype(MXU_DTYPE), w2_ref[...],      # W2 is (D2p, OUT_DIM)
                preferred_element_type=jnp.float32) + b2_ref[...]
    o_ref[...] = o.astype(o_ref.dtype)                 # only 4 real lanes stored


def mlp_querynet_pallas(x_rows, pw, *, tm=TM, slope=LEAKY_SLOPE):
    """x_rows: (Mp, D0p) bf16, rows a multiple of tm, cols lane-padded.
    pw: channel-padded (in, out)-layout bf16 weights and f32 (1, out) biases;
    the last layer's out dim is left at OUT_DIM (no lane padding)."""
    Mp, D0 = x_rows.shape
    D1 = pw["w0"].shape[1]
    D2 = pw["w1"].shape[1]
    Do = pw["w2"].shape[1]                             # == OUT_DIM
    assert Mp % tm == 0

    return pl.pallas_call(
        functools.partial(_mlp_query_kernel, slope=slope),
        out_shape=jax.ShapeDtypeStruct((Mp, Do), jnp.float32),
        grid=(Mp // tm,),
        in_specs=[
            pl.BlockSpec((tm, D0),  lambda i: (i, 0)),   # activations tile
            pl.BlockSpec((D0, D1),  lambda i: (0, 0)),   # W0 (full, resident)
            pl.BlockSpec((1, D1),   lambda i: (0, 0)),   # b0
            pl.BlockSpec((D1, D2),  lambda i: (0, 0)),   # W1
            pl.BlockSpec((1, D2),   lambda i: (0, 0)),   # b1
            pl.BlockSpec((D2, Do),  lambda i: (0, 0)),   # W2 (out dim = 4)
            pl.BlockSpec((1, Do),   lambda i: (0, 0)),   # b2
        ],
        out_specs=pl.BlockSpec((tm, Do), lambda i: (i, 0)),
        compiler_params=pltpu.CompilerParams(
            dimension_semantics=("parallel",)),
    )(x_rows, pw["w0"], pw["b0"], pw["w1"], pw["b1"], pw["w2"], pw["b2"])


# ======================== parameter prep (done once) =========================
def prepare_padded_params(params, *, mxu_dtype=MXU_DTYPE):
    """Transpose PyTorch (out, in) Linear weights to (in, out), zero-pad the
    channel dims once so intermediates are lane-dense (the last layer's out dim
    is NOT padded -- the kernel writes only the 4 real lanes), and cast weights
    to bf16 for the MXU.  Biases stay f32 (added post-accumulation)."""
    pw = {}
    prev = _rup(params["w0"].shape[1], LANE)     # padded input feature dim
    for i in range(3):
        w = params["w%d" % i].astype(jnp.float32)
        b = params["b%d" % i].astype(jnp.float32)
        dout, din = w.shape
        doutp = dout if i == 2 else _rup(dout, LANE)
        wt = jnp.zeros((prev, doutp), jnp.float32).at[:din, :dout].set(w.T)
        pw["w%d" % i] = wt.astype(mxu_dtype)
        pw["b%d" % i] = jnp.zeros((1, doutp), jnp.float32).at[0, :dout].set(b)
        prev = doutp
    return pw


# =============================== forward pass ================================
@jax.jit
def mlp_querynet_forward(pw, img_feats, pts):
    """img_feats: (B, N, C), pts: (B, N, 3) (unused, as in the reference)."""
    del pts                                      # unused by MLP_QueryNet.forward
    B, N, C = img_feats.shape
    M = B * N
    D0 = pw["w0"].shape[0]

    x = img_feats.reshape(M, C).astype(MXU_DTYPE)   # bf16 DMA into the kernel
    if C < D0:                                   # lane-pad input channels (static)
        x = jnp.pad(x, ((0, 0), (0, D0 - C)))
    Mp = _rup(M, TM)
    if Mp != M:                                  # row remainder (no-op for demo)
        x = jnp.pad(x, ((0, Mp - M), (0, 0)))

    out = mlp_querynet_pallas(x, pw)             # (Mp, OUT_DIM), no lane slice
    if Mp != M:
        out = out[:M]
    return out.reshape(B, N, OUT_DIM)


# ============================ pure-JAX references ============================
def mlp_querynet_reference(params, img_feats, mxu_dtype=None):
    """If mxu_dtype is set, mimic the kernel's matmul input dtype (bf16 inputs,
    f32 accumulation); otherwise full-f32 HIGHEST-precision reference."""
    def mcast(a):
        return a.astype(mxu_dtype) if mxu_dtype is not None else a
    prec = None if mxu_dtype is not None else jax.lax.Precision.HIGHEST
    h = img_feats.astype(jnp.float32)
    for i in range(3):
        w = params["w%d" % i].astype(jnp.float32)
        b = params["b%d" % i].astype(jnp.float32)
        h = jnp.dot(mcast(h), mcast(w.T), precision=prec,
                    preferred_element_type=jnp.float32) + b
        if i < 2:
            h = jnp.maximum(h, h * LEAKY_SLOPE)
    return h


# ============================== parameter init ===============================
def init_params(key):
    keys = iter(jax.random.split(key, 8))

    def nrm(shape, scale=0.05):
        return (scale * jax.random.normal(next(keys), shape)).astype(jnp.float32)

    dims = FEAT_DIMS + (OUT_DIM,)
    p = {}
    for i in range(3):                           # PyTorch Linear layout (out, in)
        p["w%d" % i] = nrm((dims[i + 1], dims[i]))
        p["b%d" % i] = nrm((dims[i + 1],))
    return p


# ==================================== main ===================================
if __name__ == "__main__":
    key = jax.random.PRNGKey(0)
    k_par, k_feat, k_pts = jax.random.split(key, 3)

    Bsz, Npt = 2, 512                            # M = 1024 -> 4 parallel row blocks
    params = init_params(k_par)
    img_feats = jax.random.normal(k_feat, (Bsz, Npt, FEAT_DIMS[0]), jnp.float32)
    pts = jax.random.uniform(k_pts, (Bsz, Npt, PT_DIM), jnp.float32, -1.0, 1.0)

    pw = prepare_padded_params(params)

    out = mlp_querynet_forward(pw, img_feats, pts)
    out = jax.block_until_ready(out)
    assert out.shape == (Bsz, Npt, OUT_DIM)

    # Tight check against a bf16-matched reference (same matmul input dtype).
    ref_bf16 = mlp_querynet_reference(params, img_feats, mxu_dtype=MXU_DTYPE)
    err_bf16 = float(jnp.max(jnp.abs(out - ref_bf16)))
    assert err_bf16 < 2e-3, "max |pallas - bf16 reference| = %g" % err_bf16

    # Deliberately loose check against the full-f32 HIGHEST reference
    # (bf16 matmul inputs vs f32: expected O(1e-3) drift on this 3-layer chain).
    ref_f32 = mlp_querynet_reference(params, img_feats)
    err_f32 = float(jnp.max(jnp.abs(out - ref_f32)))
    assert err_f32 < 5e-2, "max |pallas - f32 reference| = %g" % err_f32

    print("KERNEL_OK")
</pallas_src>

<mosaic_0001>
module attributes {stable_mosaic.version = 11 : i64} {
  func.func @_mlp_query_kernel(%arg0: i32, %arg1: memref<256x256xbf16, #tpu.memory_space<vmem>>, %arg2: memref<256x256xbf16, #tpu.memory_space<vmem>>, %arg3: memref<1x256xf32, #tpu.memory_space<vmem>>, %arg4: memref<256x128xbf16, #tpu.memory_space<vmem>>, %arg5: memref<1x128xf32, #tpu.memory_space<vmem>>, %arg6: memref<128x4xbf16, #tpu.memory_space<vmem>>, %arg7: memref<1x4xf32, #tpu.memory_space<vmem>>, %arg8: memref<256x4xf32, #tpu.memory_space<vmem>>) attributes {dimension_semantics = [#tpu.dimension_semantics<parallel>], iteration_bounds = array<i64: 4>, scalar_prefetch = 0 : i64, scratch_operands = 0 : i64, tpu.core_type = #tpu.core_type<tc>, window_params = [{transform_indices = @transform_0, window_bounds = array<i64: 256, 256>}, {pipeline_mode = #tpu.pipeline_mode<synchronous>, transform_indices = @transform_1, window_bounds = array<i64: 256, 256>}, {pipeline_mode = #tpu.pipeline_mode<synchronous>, transform_indices = @transform_2, window_bounds = array<i64: 1, 256>}, {pipeline_mode = #tpu.pipeline_mode<synchronous>, transform_indices = @transform_3, window_bounds = array<i64: 256, 128>}, {pipeline_mode = #tpu.pipeline_mode<synchronous>, transform_indices = @transform_4, window_bounds = array<i64: 1, 128>}, {pipeline_mode = #tpu.pipeline_mode<synchronous>, transform_indices = @transform_5, window_bounds = array<i64: 128, 4>}, {pipeline_mode = #tpu.pipeline_mode<synchronous>, transform_indices = @transform_6, window_bounds = array<i64: 1, 4>}, {transform_indices = @transform_7, window_bounds = array<i64: 256, 4>}]} {
    %c0 = arith.constant 0 : index
    %c0_0 = arith.constant 0 : index
    %0 = vector.load %arg1[%c0, %c0_0] : memref<256x256xbf16, #tpu.memory_space<vmem>>, vector<256x256xbf16>
    %c0_1 = arith.constant 0 : index
    %c0_2 = arith.constant 0 : index
    %1 = vector.load %arg2[%c0_1, %c0_2] : memref<256x256xbf16, #tpu.memory_space<vmem>>, vector<256x256xbf16>
    %cst = arith.constant dense<0.000000e+00> : vector<256x256xf32>
    %2 = tpu.matmul %0, %1, %cst {dimension_numbers = #tpu.dot_dimension_numbers<[1], [0], [0], [1], [0, 0, 1, 1], [], []>} : vector<256x256xbf16>, vector<256x256xbf16>, vector<256x256xf32> -> vector<256x256xf32>
    %c0_3 = arith.constant 0 : index
    %c0_4 = arith.constant 0 : index
    %3 = vector.load %arg3[%c0_3, %c0_4] : memref<1x256xf32, #tpu.memory_space<vmem>>, vector<1x256xf32>
    %4 = vector.broadcast %3 : vector<1x256xf32> to vector<256x256xf32>
    %5 = arith.addf %2, %4 : vector<256x256xf32>
    %cst_5 = arith.constant 0.00999999977 : f32
    %6 = vector.broadcast %cst_5 : f32 to vector<256x256xf32>
    %7 = arith.mulf %5, %6 : vector<256x256xf32>
    %8 = arith.maximumf %5, %7 : vector<256x256xf32>
    %9 = arith.truncf %8 : vector<256x256xf32> to vector<256x256xbf16>
    %c0_6 = arith.constant 0 : index
    %c0_7 = arith.constant 0 : index
    %10 = vector.load %arg4[%c0_6, %c0_7] : memref<256x128xbf16, #tpu.memory_space<vmem>>, vector<256x128xbf16>
    %cst_8 = arith.constant dense<0.000000e+00> : vector<256x128xf32>
    %11 = tpu.matmul %9, %10, %cst_8 {dimension_numbers = #tpu.dot_dimension_numbers<[1], [0], [0], [1], [0, 0, 1, 1], [], []>} : vector<256x256xbf16>, vector<256x128xbf16>, vector<256x128xf32> -> vector<256x128xf32>
    %c0_9 = arith.constant 0 : index
    %c0_10 = arith.constant 0 : index
    %12 = vector.load %arg5[%c0_9, %c0_10] : memref<1x128xf32, #tpu.memory_space<vmem>>, vector<1x128xf32>
    %13 = vector.broadcast %12 : vector<1x128xf32> to vector<256x128xf32>
    %14 = arith.addf %11, %13 : vector<256x128xf32>
    %cst_11 = arith.constant 0.00999999977 : f32
    %15 = vector.broadcast %cst_11 : f32 to vector<256x128xf32>
    %16 = arith.mulf %14, %15 : vector<256x128xf32>
    %17 = arith.maximumf %14, %16 : vector<256x128xf32>
    %18 = arith.truncf %17 : vector<256x128xf32> to vector<256x128xbf16>
    %c0_12 = arith.constant 0 : index
    %c0_13 = arith.constant 0 : index
    %19 = vector.load %arg6[%c0_12, %c0_13] : memref<128x4xbf16, #tpu.memory_space<vmem>>, vector<128x4xbf16>
    %cst_14 = arith.constant dense<0.000000e+00> : vector<256x4xf32>
    %20 = tpu.matmul %18, %19, %cst_14 {dimension_numbers = #tpu.dot_dimension_numbers<[1], [0], [0], [1], [0, 0, 1, 1], [], []>} : vector<256x128xbf16>, vector<128x4xbf16>, vector<256x4xf32> -> vector<256x4xf32>
    %c0_15 = arith.constant 0 : index
    %c0_16 = arith.constant 0 : index
    %21 = vector.load %arg7[%c0_15, %c0_16] : memref<1x4xf32, #tpu.memory_space<vmem>>, vector<1x4xf32>
    %22 = vector.broadcast %21 : vector<1x4xf32> to vector<256x4xf32>
    %23 = arith.addf %20, %22 : vector<256x4xf32>
    %c0_17 = arith.constant 0 : index
    %c0_18 = arith.constant 0 : index
    %24 = vector.load %arg8[%c0_17, %c0_18] : memref<256x4xf32, #tpu.memory_space<vmem>>, vector<256x4xf32>
    tpu.vector_store %arg8[%c0_17, %c0_18], %23 {strides = array<i32>} : memref<256x4xf32, #tpu.memory_space<vmem>>, vector<256x4xf32>,
    return
  }
  func.func @transform_0(%arg0: i32) -> (i32, i32) {
    %c0_i32 = arith.constant 0 : i32
    %c0_i32_0 = arith.constant 0 : i32
    return %arg0, %c0_i32 : i32, i32
  }
  func.func @transform_1(%arg0: i32) -> (i32, i32) {
    %c0_i32 = arith.constant 0 : i32
    %c0_i32_0 = arith.constant 0 : i32
    %c0_i32_1 = arith.constant 0 : i32
    return %c0_i32, %c0_i32_0 : i32, i32
  }
  func.func @transform_2(%arg0: i32) -> (i32, i32) {
    %c0_i32 = arith.constant 0 : i32
    %c0_i32_0 = arith.constant 0 : i32
    %c0_i32_1 = arith.constant 0 : i32
    return %c0_i32, %c0_i32_0 : i32, i32
  }
  func.func @transform_3(%arg0: i32) -> (i32, i32) {
    %c0_i32 = arith.constant 0 : i32
    %c0_i32_0 = arith.constant 0 : i32
    %c0_i32_1 = arith.constant 0 : i32
    return %c0_i32, %c0_i32_0 : i32, i32
  }
  func.func @transform_4(%arg0: i32) -> (i32, i32) {
    %c0_i32 = arith.constant 0 : i32
    %c0_i32_0 = arith.constant 0 : i32
    %c0_i32_1 = arith.constant 0 : i32
    return %c0_i32, %c0_i32_0 : i32, i32
  }
  func.func @transform_5(%arg0: i32) -> (i32, i32) {
    %c0_i32 = arith.constant 0 : i32
    %c0_i32_0 = arith.constant 0 : i32
    %c0_i32_1 = arith.constant 0 : i32
    return %c0_i32, %c0_i32_0 : i32, i32
  }
  func.func @transform_6(%arg0: i32) -> (i32, i32) {
    %c0_i32 = arith.constant 0 : i32
    %c0_i32_0 = arith.constant 0 : i32
    %c0_i32_1 = arith.constant 0 : i32
    return %c0_i32, %c0_i32_0 : i32, i32
  }
  func.func @transform_7(%arg0: i32) -> (i32, i32) {
    %c0_i32 = arith.constant 0 : i32
    %c0_i32_0 = arith.constant 0 : i32
    return %arg0, %c0_i32 : i32, i32
  }
}

</mosaic_0001>

<llo_original>
// kernel: mlp_querynet_forward.1
$region0: #{mlp_querynet_forward.1}
  #allocation0 [shape = 'u32[]', space=smem, size = 0x4, offset = 0x4, fixed_abs, tag = 'smem constant byte address 0x4 - core index']
  #allocation1 [shape = 'u32[144,128]{1,0:T(1,128)}', space=vmem, size = 0x12000, scoped, tag = 'internal scratch']
  %s0 = inlined_call_operand.vmem [shape: bf16[1024,256], index: 0, kind: input, shape index: {}]
  %s1 = inlined_call_operand.vmem [shape: bf16[256,256], index: 1, kind: input, shape index: {}]
  %s2 = inlined_call_operand.vmem [shape: f32[1,256], index: 2, kind: input, shape index: {}]
  %s3 = inlined_call_operand.vmem [shape: bf16[256,128], index: 3, kind: input, shape index: {}]
  %s4 = inlined_call_operand.vmem [shape: f32[1,128], index: 4, kind: input, shape index: {}]
  %s5 = inlined_call_operand.vmem [shape: bf16[128,4], index: 5, kind: input, shape index: {}]
  %s6 = inlined_call_operand.vmem [shape: f32[1,4], index: 6, kind: input, shape index: {}]
  %s7 = inlined_call_operand.vmem [shape: f32[1024,4], index: 7, kind: output, shape index: {}]
  %s8 = sld [smem:[#allocation0]]
  $region61: #{mlp_querynet_forward.1} parent=0
    _
  %s10 = ssub.s32 1, %s8
  %s11 = scalar_select 0, %s10, %s8
  loop: start=0, step=1, limit=6
  $region2: #{mlp_querynet_forward.1} parent=0 // loop_pre_header
    _
  $region3: #{mlp_querynet_forward.1} parent=0 // loop_header
    %s13 = sphi 0, %s17
    %p14 = scmp.ge.s32.totalorder %s13, 6
    %s23 = sphi 0, %s25
    %s26 = sphi 0, %s23
    %s27 = sphi 0, %s26
    %s43 = sphi 0, %s27
    %s47 = sphi 0, %s47
    %s49 = sphi 0, %s47
    %s50 = sphi 0, %s49
    %s64 = sphi 0, %s50
    %s68 = sphi 0, %s68
    %s70 = sphi 0, %s68
    %s71 = sphi 0, %s70
    %s85 = sphi 0, %s71
    %s89 = sphi 0, %s89
    %s91 = sphi 0, %s89
    %s92 = sphi 0, %s91
    %s106 = sphi 0, %s92
    %s110 = sphi 0, %s110
    %s112 = sphi 0, %s110
    %s113 = sphi 0, %s112
    %s127 = sphi 0, %s113
    %s131 = sphi 0, %s131
    %s133 = sphi 0, %s131
    %s134 = sphi 0, %s133
    %s148 = sphi 0, %s134
    %s152 = sphi 0, %s152
    %s154 = sphi 0, %s152
    %s155 = sphi 0, %s154
    %s169 = sphi 0, %s155
    %s175 = sphi 0, %s177
    %s178 = sphi 0, %s175
    %s179 = sphi 0, %s178
    %s195 = sphi 0, %s179
  $region4: #{mlp_querynet_forward.1} parent=0 // loop_header_branch
    %16 = sbr.rel (%p14) target = $region8
  $region5: #{mlp_querynet_forward.1} parent=0 // loop_body
    %s18 = ssub.s32 %s13, 1
    %s19 = ssub.s32 %s13, 2
    %s20 = sadd.s32 %s13, 1
    %s21 = ssub.s32 %s13, %s20
    %p22 = scmp.eq.s32.totalorder %s21, 0
    %s24 = sadd.s32 %s23, 1
    %s25 = scalar_select %p22, %s23, %s24
    %p28 = pneg %p22
    %p29 = scmp.eq.s32.totalorder %s13, 3
    %p30 = por %p28, %p29
    %p31 = scmp.ne.s32.totalorder %s23, %s26
    %p32 = scmp.eq.s32.totalorder %s13, 0
    %p33 = por %p31, %p32
    %p34 = scmp.ne.s32.totalorder %s23, %s26
    %p35 = scmp.eq.s32.totalorder %s18, 3
    %p36 = por %p34, %p35
    %p37 = scmp.ne.s32.totalorder %s26, %s27
    %p38 = scmp.eq.s32.totalorder %s18, 0
    %p39 = por %p37, %p38
    %p40 = scmp.ne.s32.totalorder %s26, %s27
    %p41 = scmp.eq.s32.totalorder %s19, 3
    %p42 = por %p40, %p41
    %p44 = scmp.ne.s32.totalorder %s27, %s43
    %p45 = scmp.eq.s32.totalorder %s19, 0
    %p46 = por %p44, %p45
    %s48 = sadd.s32 %s47, 1
    %p51 = scmp.eq.s32.totalorder %s13, 3
    %p52 = scmp.ne.s32.totalorder %s47, %s49
    %p53 = scmp.eq.s32.totalorder %s13, 0
    %p54 = por %p52, %p53
    %p55 = scmp.ne.s32.totalorder %s47, %s49
    %p56 = scmp.eq.s32.totalorder %s18, 3
    %p57 = por %p55, %p56
    %p58 = scmp.ne.s32.totalorder %s49, %s50
    %p59 = scmp.eq.s32.totalorder %s18, 0
    %p60 = por %p58, %p59
    %p61 = scmp.ne.s32.totalorder %s49, %s50
    %p62 = scmp.eq.s32.totalorder %s19, 3
    %p63 = por %p61, %p62
    %p65 = scmp.ne.s32.totalorder %s50, %s64
    %p66 = scmp.eq.s32.totalorder %s19, 0
    %p67 = por %p65, %p66
    %s69 = sadd.s32 %s68, 1
    %p72 = scmp.eq.s32.totalorder %s13, 3
    %p73 = scmp.ne.s32.totalorder %s68, %s70
    %p74 = scmp.eq.s32.totalorder %s13, 0
    %p75 = por %p73, %p74
    %p76 = scmp.ne.s32.totalorder %s68, %s70
    %p77 = scmp.eq.s32.totalorder %s18, 3
    %p78 = por %p76, %p77
    %p79 = scmp.ne.s32.totalorder %s70, %s71
    %p80 = scmp.eq.s32.totalorder %s18, 0
    %p81 = por %p79, %p80
    %p82 = scmp.ne.s32.totalorder %s70, %s71
    %p83 = scmp.eq.s32.totalorder %s19, 3
    %p84 = por %p82, %p83
    %p86 = scmp.ne.s32.totalorder %s71, %s85
    %p87 = scmp.eq.s32.totalorder %s19, 0
    %p88 = por %p86, %p87
    %s90 = sadd.s32 %s89, 1
    %p93 = scmp.eq.s32.totalorder %s13, 3
    %p94 = scmp.ne.s32.totalorder %s89, %s91
    %p95 = scmp.eq.s32.totalorder %s13, 0
    %p96 = por %p94, %p95
    %p97 = scmp.ne.s32.totalorder %s89, %s91
    %p98 = scmp.eq.s32.totalorder %s18, 3
    %p99 = por %p97, %p98
    %p100 = scmp.ne.s32.totalorder %s91, %s92
    %p101 = scmp.eq.s32.totalorder %s18, 0
    %p102 = por %p100, %p101
    %p103 = scmp.ne.s32.totalorder %s91, %s92
    %p104 = scmp.eq.s32.totalorder %s19, 3
    %p105 = por %p103, %p104
    %p107 = scmp.ne.s32.totalorder %s92, %s106
    %p108 = scmp.eq.s32.totalorder %s19, 0
    %p109 = por %p107, %p108
    %s111 = sadd.s32 %s110, 1
    %p114 = scmp.eq.s32.totalorder %s13, 3
    %p115 = scmp.ne.s32.totalorder %s110, %s112
    %p116 = scmp.eq.s32.totalorder %s13, 0
    %p117 = por %p115, %p116
    %p118 = scmp.ne.s32.totalorder %s110, %s112
    %p119 = scmp.eq.s32.totalorder %s18, 3
    %p120 = por %p118, %p119
    %p121 = scmp.ne.s32.totalorder %s112, %s113
    %p122 = scmp.eq.s32.totalorder %s18, 0
    %p123 = por %p121, %p122
    %p124 = scmp.ne.s32.totalorder %s112, %s113
    %p125 = scmp.eq.s32.totalorder %s19, 3
    %p126 = por %p124, %p125
    %p128 = scmp.ne.s32.totalorder %s113, %s127
    %p129 = scmp.eq.s32.totalorder %s19, 0
    %p130 = por %p128, %p129
    %s132 = sadd.s32 %s131, 1
    %p135 = scmp.eq.s32.totalorder %s13, 3
    %p136 = scmp.ne.s32.totalorder %s131, %s133
    %p137 = scmp.eq.s32.totalorder %s13, 0
    %p138 = por %p136, %p137
    %p139 = scmp.ne.s32.totalorder %s131, %s133
    %p140 = scmp.eq.s32.totalorder %s18, 3
    %p141 = por %p139, %p140
    %p142 = scmp.ne.s32.totalorder %s133, %s134
    %p143 = scmp.eq.s32.totalorder %s18, 0
    %p144 = por %p142, %p143
    %p145 = scmp.ne.s32.totalorder %s133, %s134
    %p146 = scmp.eq.s32.totalorder %s19, 3
    %p147 = por %p145, %p146
    %p149 = scmp.ne.s32.totalorder %s134, %s148
    %p150 = scmp.eq.s32.totalorder %s19, 0
    %p151 = por %p149, %p150
    %s153 = sadd.s32 %s152, 1
    %p156 = scmp.eq.s32.totalorder %s13, 3
    %p157 = scmp.ne.s32.totalorder %s152, %s154
    %p158 = scmp.eq.s32.totalorder %s13, 0
    %p159 = por %p157, %p158
    %p160 = scmp.ne.s32.totalorder %s152, %s154
    %p161 = scmp.eq.s32.totalorder %s18, 3
    %p162 = por %p160, %p161
    %p163 = scmp.ne.s32.totalorder %s154, %s155
    %p164 = scmp.eq.s32.totalorder %s18, 0
    %p165 = por %p163, %p164
    %p166 = scmp.ne.s32.totalorder %s154, %s155
    %p167 = scmp.eq.s32.totalorder %s19, 3
    %p168 = por %p166, %p167
    %p170 = scmp.ne.s32.totalorder %s155, %s169
    %p171 = scmp.eq.s32.totalorder %s19, 0
    %p172 = por %p170, %p171
    %s173 = ssub.s32 %s13, %s20
    %p174 = scmp.eq.s32.totalorder %s173, 0
    %s176 = sadd.s32 %s175, 1
    %s177 = scalar_select %p174, %s175, %s176
    %p180 = pneg %p174
    %p181 = scmp.eq.s32.totalorder %s13, 3
    %p182 = por %p180, %p181
    %p183 = scmp.ne.s32.totalorder %s175, %s178
    %p184 = scmp.eq.s32.totalorder %s13, 0
    %p185 = por %p183, %p184
    %p186 = scmp.ne.s32.totalorder %s175, %s178
    %p187 = scmp.eq.s32.totalorder %s18, 3
    %p188 = por %p186, %p187
    %p189 = scmp.ne.s32.totalorder %s178, %s179
    %p190 = scmp.eq.s32.totalorder %s18, 0
    %p191 = por %p189, %p190
    %p192 = scmp.ne.s32.totalorder %s178, %s179
    %p193 = scmp.eq.s32.totalorder %s19, 3
    %p194 = por %p192, %p193
    %p196 = scmp.ne.s32.totalorder %s179, %s195
    %p197 = scmp.eq.s32.totalorder %s19, 0
    %p198 = por %p196, %p197
    %p199 = scmp.le.s32.totalorder 1, %s13
    %p200 = scmp.lt.s32.totalorder %s13, 5
    %p201 = pnand %p199, %p200
    %p202 = pneg %p201
    // Predicated region
    $region9: #{mlp_querynet_forward.1} parent=5 // pred_check
      _
    $region10: #{mlp_querynet_forward.1} parent=5 // pred_check_branch
      %204 = sbr.rel (%p201) target = $region12
    $region11: #{mlp_querynet_forward.1} parent=5 // pred_region
      %s205 = ssub.s32 %s13, 1
      // Predicated region
      $region13: #{mlp_querynet_forward.1} parent=11 // pred_check
        %p206 = pneg %p60
      $region14: #{mlp_querynet_forward.1} parent=11 // pred_check_branch
        %208 = sbr.rel (%p206) target = $region16
      $region15: #{mlp_querynet_forward.1} parent=11 // pred_region
        _
      $region16: #{mlp_querynet_forward.1} parent=11 // pred_fallthru
        _
      // Predicated region
      $region17: #{mlp_querynet_forward.1} parent=11 // pred_check
        %p209 = pneg %p81
      $region18: #{mlp_querynet_forward.1} parent=11 // pred_check_branch
        %211 = sbr.rel (%p209) target = $region20
      $region19: #{mlp_querynet_forward.1} parent=11 // pred_region
        _
      $region20: #{mlp_querynet_forward.1} parent=11 // pred_fallthru
        _
      // Predicated region
      $region21: #{mlp_querynet_forward.1} parent=11 // pred_check
        %p212 = pneg %p102
      $region22: #{mlp_querynet_forward.1} parent=11 // pred_check_branch
        %214 = sbr.rel (%p212) target = $region24
      $region23: #{mlp_querynet_forward.1} parent=11 // pred_region
        _
      $region24: #{mlp_querynet_forward.1} parent=11 // pred_fallthru
        _
      // Predicated region
      $region25: #{mlp_querynet_forward.1} parent=11 // pred_check
        %p215 = pneg %p123
      $region26: #{mlp_querynet_forward.1} parent=11 // pred_check_branch
        %217 = sbr.rel (%p215) target = $region28
      $region27: #{mlp_querynet_forward.1} parent=11 // pred_region
        _
      $region28: #{mlp_querynet_forward.1} parent=11 // pred_fallthru
        _
      // Predicated region
      $region29: #{mlp_querynet_forward.1} parent=11 // pred_check
        %p218 = pneg %p144
      $region30: #{mlp_querynet_forward.1} parent=11 // pred_check_branch
        %220 = sbr.rel (%p218) target = $region32
      $region31: #{mlp_querynet_forward.1} parent=11 // pred_region
        _
      $region32: #{mlp_querynet_forward.1} parent=11 // pred_fallthru
        _
      // Predicated region
      $region33: #{mlp_querynet_forward.1} parent=11 // pred_check
        %p221 = pneg %p165
      $region34: #{mlp_querynet_forward.1} parent=11 // pred_check_branch
        %223 = sbr.rel (%p221) target = $region36
      $region35: #{mlp_querynet_forward.1} parent=11 // pred_region
        _
      $region36: #{mlp_querynet_forward.1} parent=11 // pred_fallthru
        _
    $region12: #{mlp_querynet_forward.1} parent=5 // pred_fallthru
      _
    %p224 = scmp.lt.s32.totalorder %s13, 4
    // Predicated region
    $region37: #{mlp_querynet_forward.1} parent=5 // pred_check
      %p225 = pneg %p224
    $region38: #{mlp_querynet_forward.1} parent=5 // pred_check_branch
      %227 = sbr.rel (%p225) target = $region40
    $region39: #{mlp_querynet_forward.1} parent=5 // pred_region
      // Predicated region
      $region41: #{mlp_querynet_forward.1} parent=39 // pred_check
        %p228 = pneg %p33
      $region42: #{mlp_querynet_forward.1} parent=39 // pred_check_branch
        %230 = sbr.rel (%p228) target = $region44
      $region43: #{mlp_querynet_forward.1} parent=39 // pred_region
        %s231 = smul.u32 32, %s13
        %p232 = scmp.lt.s32.totalorder %s231, 127
        %s233 = scalar_select %p232, %s231, 127
        %s234 = smul.addr %s233, 2
        %s235 = smul.addr %s234, 4
        %s236 = scalar_lea.vmem %s0, %s235
        %s237 = smul.u32 32, %s13
      $region44: #{mlp_querynet_forward.1} parent=39 // pred_fallthru
        _
    $region40: #{mlp_querynet_forward.1} parent=5 // pred_fallthru
      _
    %p238 = scmp.le.s32.totalorder 1, %s13
    %p239 = scmp.lt.s32.totalorder %s13, 5
    %p240 = pnand %p238, %p239
    %p241 = pneg %p240
    // Predicated region
    $region45: #{mlp_querynet_forward.1} parent=5 // pred_check
      _
    $region46: #{mlp_querynet_forward.1} parent=5 // pred_check_branch
      %243 = sbr.rel (%p240) target = $region48
    $region47: #{mlp_querynet_forward.1} parent=5 // pred_region
      %s244 = ssub.s32 %s13, 1
      %s245 = smul.u32 32, %s18
      %p246 = scmp.lt.s32.totalorder %s245, 127
      %s247 = scalar_select %p246, %s245, 127
      %s248 = smul.addr %s247, 2
      %s249 = smul.addr %s248, 4
      %s250 = scalar_lea.vmem %s0, %s249
      %p251 = pneg %p39
      %p252 = pneg %p36
      %p253 = pneg %p60
      %p254 = pneg %p57
      %p255 = pneg %p81
      %p256 = pneg %p78
      %p257 = pneg %p102
      %p258 = pneg %p99
      %p259 = pneg %p123
      %p260 = pneg %p120
      %p261 = pneg %p144
      %p262 = pneg %p141
      %p263 = pneg %p165
      %p264 = pneg %p162
      %p265 = pneg %p191
      %p266 = pneg %p188
      %s267 = smul.u32 32, %s18
      %p268 = scmp.lt.s32.totalorder %s267, 127
      %s269 = scalar_select %p268, %s267, 127
      %s270 = smul.addr %s269, 8
      %s271 = scalar_lea.vmem %s7, %s270
      %s272 = smul.u32 32, %s18
      %p273 = scmp.lt.s32.totalorder %s272, 127
      %s274 = scalar_select %p273, %s272, 127
      %s275 = smul.addr %s274, 2
      %s276 = smul.addr %s275, 4
      %s277 = scalar_lea.vmem %s0, %s276
      %s278 = smul.u32 32, %s18
      %s279 = smul.u32 32, %s18
      %p280 = scmp.lt.s32.totalorder %s279, 127
      %s281 = scalar_select %p280, %s279, 127
      %s282 = smul.addr %s281, 8
      %s283 = scalar_lea.vmem %s7, %s282
      %s284 = smul.u32 32, %s18
      %v286 = vld [vmem:[%s277] sm:$0xff]
      %v287 = vld [vmem:[%s277 + $0x8] sm:$0xff]
      %v288 = vld [vmem:[%s277 + $0x10] sm:$0xff]
      %v289 = vld [vmem:[%s277 + $0x18] sm:$0xff]
      %v290 = vld [vmem:[%s277 + $0x20] sm:$0xff]
      %v291 = vld [vmem:[%s277 + $0x28] sm:$0xff]
      %v292 = vld [vmem:[%s277 + $0x30] sm:$0xff]
      %v293 = vld [vmem:[%s277 + $0x38] sm:$0xff]
      %v294 = vld [vmem:[%s277 + $0x40] sm:$0xff]
      %v295 = vld [vmem:[%s277 + $0x48] sm:$0xff]
      %v296 = vld [vmem:[%s277 + $0x50] sm:$0xff]
      %v297 = vld [vmem:[%s277 + $0x58] sm:$0xff]
      %v298 = vld [vmem:[%s277 + $0x60] sm:$0xff]
      %v299 = vld [vmem:[%s277 + $0x68] sm:$0xff]
      %v300 = vld [vmem:[%s277 + $0x70] sm:$0xff]
      %v301 = vld [vmem:[%s277 + $0x78] sm:$0xff]
      %v302 = vld [vmem:[%s277 + $0x80] sm:$0xff]
      %v303 = vld [vmem:[%s277 + $0x88] sm:$0xff]
      %v304 = vld [vmem:[%s277 + $0x90] sm:$0xff]
      %v305 = vld [vmem:[%s277 + $0x98] sm:$0xff]
      %v306 = vld [vmem:[%s277 + $0xa0] sm:$0xff]
      %v307 = vld [vmem:[%s277 + $0xa8] sm:$0xff]
      %v308 = vld [vmem:[%s277 + $0xb0] sm:$0xff]
      %v309 = vld [vmem:[%s277 + $0xb8] sm:$0xff]
      %v310 = vld [vmem:[%s277 + $0xc0] sm:$0xff]
      %v311 = vld [vmem:[%s277 + $0xc8] sm:$0xff]
      %v312 = vld [vmem:[%s277 + $0xd0] sm:$0xff]
      %v313 = vld [vmem:[%s277 + $0xd8] sm:$0xff]
      %v314 = vld [vmem:[%s277 + $0xe0] sm:$0xff]
      %v315 = vld [vmem:[%s277 + $0xe8] sm:$0xff]
      %v316 = vld [vmem:[%s277 + $0xf0] sm:$0xff]
      %v317 = vld [vmem:[%s277 + $0xf8] sm:$0xff]
      %v318 = vld [vmem:[%s1] sm:$0xff]
      %v319 = vld [vmem:[%s1 + $0x8] sm:$0xff]
      %v320 = vld [vmem:[%s1 + $0x10] sm:$0xff]
      %v321 = vld [vmem:[%s1 + $0x18] sm:$0xff]
      %v322 = vld [vmem:[%s1 + $0x20] sm:$0xff]
      %v323 = vld [vmem:[%s1 + $0x28] sm:$0xff]
      %v324 = vld [vmem:[%s1 + $0x30] sm:$0xff]
      %v325 = vld [vmem:[%s1 + $0x38] sm:$0xff]
      %v326 = vld [vmem:[%s1 + $0x40] sm:$0xff]
      %v327 = vld [vmem:[%s1 + $0x48] sm:$0xff]
      %v328 = vld [vmem:[%s1 + $0x50] sm:$0xff]
      %v329 = vld [vmem:[%s1 + $0x58] sm:$0xff]
      %v330 = vld [vmem:[%s1 + $0x60] sm:$0xff]
      %v331 = vld [vmem:[%s1 + $0x68] sm:$0xff]
      %v332 = vld [vmem:[%s1 + $0x70] sm:$0xff]
      %v333 = vld [vmem:[%s1 + $0x78] sm:$0xff]
      %v334 = vld [vmem:[%s1 + $0x80] sm:$0xff]
      %v335 = vld [vmem:[%s1 + $0x88] sm:$0xff]
      %v336 = vld [vmem:[%s1 + $0x90] sm:$0xff]
      %v337 = vld [vmem:[%s1 + $0x98] sm:$0xff]
      %v338 = vld [vmem:[%s1 + $0xa0] sm:$0xff]
      %v339 = vld [vmem:[%s1 + $0xa8] sm:$0xff]
      %v340 = vld [vmem:[%s1 + $0xb0] sm:$0xff]
      %v341 = vld [vmem:[%s1 + $0xb8] sm:$0xff]
      %v342 = vld [vmem:[%s1 + $0xc0] sm:$0xff]
      %v343 = vld [vmem:[%s1 + $0xc8] sm:$0xff]
      %v344 = vld [vmem:[%s1 + $0xd0] sm:$0xff]
      %v345 = vld [vmem:[%s1 + $0xd8] sm:$0xff]
      %v346 = vld [vmem:[%s1 + $0xe0] sm:$0xff]
      %v347 = vld [vmem:[%s1 + $0xe8] sm:$0xff]
      %v348 = vld [vmem:[%s1 + $0xf0] sm:$0xff]
      %v349 = vld [vmem:[%s1 + $0xf8] sm:$0xff]
      %v350 = vld [vmem:[%s2] sm:$0x3]
      %v352 = vlaneseq
      %v353 = vshrl.u32 %v352, 7
      %v354 = vsub.s32 0, %v353
      %v355 = vrot.slane %v350, %v354
      %v356 = vlaneseq
      %v357 = vshrl.u32 %v356, 7
      %v358 = vsub.s32 1, %v357
      %v359 = vrot.slane %v350, %v358
      %v394 = vunpack.c.l.b16 %v286
      %v395 = vunpack.c.h.b16 %v286
      %v396 = vunpack.c.l.b16 %v287
      %v397 = vunpack.c.h.b16 %v287
      %v398 = vunpack.c.l.b16 %v288
      %v399 = vunpack.c.h.b16 %v288
      %v400 = vunpack.c.l.b16 %v289
      %v401 = vunpack.c.h.b16 %v289
      %v402 = vunpack.c.l.b16 %v290
      %v403 = vunpack.c.h.b16 %v290
      %v404 = vunpack.c.l.b16 %v291
      %v405 = vunpack.c.h.b16 %v291
      %v406 = vunpack.c.l.b16 %v292
      %v407 = vunpack.c.h.b16 %v292
      %v408 = vunpack.c.l.b16 %v293
      %v409 = vunpack.c.h.b16 %v293
      %v410 = vunpack.c.l.b16 %v294
      %v411 = vunpack.c.h.b16 %v294
      %v412 = vunpack.c.l.b16 %v295
      %v413 = vunpack.c.h.b16 %v295
      %v414 = vunpack.c.l.b16 %v296
      %v415 = vunpack.c.h.b16 %v296
      %v416 = vunpack.c.l.b16 %v297
      %v417 = vunpack.c.h.b16 %v297
      %v418 = vunpack.c.l.b16 %v298
      %v419 = vunpack.c.h.b16 %v298
      %v420 = vunpack.c.l.b16 %v299
      %v421 = vunpack.c.h.b16 %v299
      %v422 = vunpack.c.l.b16 %v300
      %v423 = vunpack.c.h.b16 %v300
      %v424 = vunpack.c.l.b16 %v301
      %v425 = vunpack.c.h.b16 %v301
      %v426 = vunpack.c.l.b16 %v302
      %v427 = vunpack.c.h.b16 %v302
      %v428 = vunpack.c.l.b16 %v303
      %v429 = vunpack.c.h.b16 %v303
      %v430 = vunpack.c.l.b16 %v304
      %v431 = vunpack.c.h.b16 %v304
      %v432 = vunpack.c.l.b16 %v305
      %v433 = vunpack.c.h.b16 %v305
      %v434 = vunpack.c.l.b16 %v306
      %v435 = vunpack.c.h.b16 %v306
      %v436 = vunpack.c.l.b16 %v307
      %v437 = vunpack.c.h.b16 %v307
      %v438 = vunpack.c.l.b16 %v308
      %v439 = vunpack.c.h.b16 %v308
      %v440 = vunpack.c.l.b16 %v309
      %v441 = vunpack.c.h.b16 %v309
      %v442 = vunpack.c.l.b16 %v310
      %v443 = vunpack.c.h.b16 %v310
      %v444 = vunpack.c.l.b16 %v311
      %v445 = vunpack.c.h.b16 %v311
      %v446 = vunpack.c.l.b16 %v312
      %v447 = vunpack.c.h.b16 %v312
      %v448 = vunpack.c.l.b16 %v313
      %v449 = vunpack.c.h.b16 %v313
      %v450 = vunpack.c.l.b16 %v314
      %v451 = vunpack.c.h.b16 %v314
      %v452 = vunpack.c.l.b16 %v315
      %v453 = vunpack.c.h.b16 %v315
      %v454 = vunpack.c.l.b16 %v316
      %v455 = vunpack.c.h.b16 %v316
      %v456 = vunpack.c.l.b16 %v317
      %v457 = vunpack.c.h.b16 %v317
      %v458 = vpack.c.b16 %v396, %v394
      %v459 = vpack.c.b16 %v397, %v395
      %v460 = vpack.c.b16 %v400, %v398
      %v461 = vpack.c.b16 %v401, %v399
      %v462 = vpack.c.b16 %v404, %v402
      %v463 = vpack.c.b16 %v405, %v403
      %v464 = vpack.c.b16 %v408, %v406
      %v465 = vpack.c.b16 %v409, %v407
      %v466 = vpack.c.b16 %v412, %v410
      %v467 = vpack.c.b16 %v413, %v411
      %v468 = vpack.c.b16 %v416, %v414
      %v469 = vpack.c.b16 %v417, %v415
      %v470 = vpack.c.b16 %v420, %v418
      %v471 = vpack.c.b16 %v421, %v419
      %v472 = vpack.c.b16 %v424, %v422
      %v473 = vpack.c.b16 %v425, %v423
      %v474 = vpack.c.b16 %v428, %v426
      %v475 = vpack.c.b16 %v429, %v427
      %v476 = vpack.c.b16 %v432, %v430
      %v477 = vpack.c.b16 %v433, %v431
      %v478 = vpack.c.b16 %v436, %v434
      %v479 = vpack.c.b16 %v437, %v435
      %v480 = vpack.c.b16 %v440, %v438
      %v481 = vpack.c.b16 %v441, %v439
      %v482 = vpack.c.b16 %v444, %v442
      %v483 = vpack.c.b16 %v445, %v443
      %v484 = vpack.c.b16 %v448, %v446
      %v485 = vpack.c.b16 %v449, %v447
      %v486 = vpack.c.b16 %v452, %v450
      %v487 = vpack.c.b16 %v453, %v451
      %v488 = vpack.c.b16 %v456, %v454
      %v489 = vpack.c.b16 %v457, %v455
      %v554 = vunpack.c.l.b16 %v318
      %v555 = vunpack.c.h.b16 %v318
      %v556 = vunpack.c.l.b16 %v319
      %v557 = vunpack.c.h.b16 %v319
      %v558 = vunpack.c.l.b16 %v320
      %v559 = vunpack.c.h.b16 %v320
      %v560 = vunpack.c.l.b16 %v321
      %v561 = vunpack.c.h.b16 %v321
      %v562 = vunpack.c.l.b16 %v322
      %v563 = vunpack.c.h.b16 %v322
      %v564 = vunpack.c.l.b16 %v323
      %v565 = vunpack.c.h.b16 %v323
      %v566 = vunpack.c.l.b16 %v324
      %v567 = vunpack.c.h.b16 %v324
      %v568 = vunpack.c.l.b16 %v325
      %v569 = vunpack.c.h.b16 %v325
      %v570 = vunpack.c.l.b16 %v326
      %v571 = vunpack.c.h.b16 %v326
      %v572 = vunpack.c.l.b16 %v327
      %v573 = vunpack.c.h.b16 %v327
      %v574 = vunpack.c.l.b16 %v328
      %v575 = vunpack.c.h.b16 %v328
      %v576 = vunpack.c.l.b16 %v329
      %v577 = vunpack.c.h.b16 %v329
      %v578 = vunpack.c.l.b16 %v330
      %v579 = vunpack.c.h.b16 %v330
      %v580 = vunpack.c.l.b16 %v331
      %v581 = vunpack.c.h.b16 %v331
      %v582 = vunpack.c.l.b16 %v332
      %v583 = vunpack.c.h.b16 %v332
      %v584 = vunpack.c.l.b16 %v333
      %v585 = vunpack.c.h.b16 %v333
      %v586 = vunpack.c.l.b16 %v334
      %v587 = vunpack.c.h.b16 %v334
      %v588 = vunpack.c.l.b16 %v335
      %v589 = vunpack.c.h.b16 %v335
      %v590 = vunpack.c.l.b16 %v336
      %v591 = vunpack.c.h.b16 %v336
      %v592 = vunpack.c.l.b16 %v337
      %v593 = vunpack.c.h.b16 %v337
      %v594 = vunpack.c.l.b16 %v338
      %v595 = vunpack.c.h.b16 %v338
      %v596 = vunpack.c.l.b16 %v339
      %v597 = vunpack.c.h.b16 %v339
      %v598 = vunpack.c.l.b16 %v340
      %v599 = vunpack.c.h.b16 %v340
      %v600 = vunpack.c.l.b16 %v341
      %v601 = vunpack.c.h.b16 %v341
      %v602 = vunpack.c.l.b16 %v342
      %v603 = vunpack.c.h.b16 %v342
      %v604 = vunpack.c.l.b16 %v343
      %v605 = vunpack.c.h.b16 %v343
      %v606 = vunpack.c.l.b16 %v344
      %v607 = vunpack.c.h.b16 %v344
      %v608 = vunpack.c.l.b16 %v345
      %v609 = vunpack.c.h.b16 %v345
      %v610 = vunpack.c.l.b16 %v346
      %v611 = vunpack.c.h.b16 %v346
      %v612 = vunpack.c.l.b16 %v347
      %v613 = vunpack.c.h.b16 %v347
      %v614 = vunpack.c.l.b16 %v348
      %v615 = vunpack.c.h.b16 %v348
      %v616 = vunpack.c.l.b16 %v349
      %v617 = vunpack.c.h.b16 %v349
      %v618 = vpack.c.b16 %v556, %v554
      %v619 = vpack.c.b16 %v557, %v555
      %v620 = vpack.c.b16 %v560, %v558
      %v621 = vpack.c.b16 %v561, %v559
      %v622 = vpack.c.b16 %v564, %v562
      %v623 = vpack.c.b16 %v565, %v563
      %v624 = vpack.c.b16 %v568, %v566
      %v625 = vpack.c.b16 %v569, %v567
      %v626 = vpack.c.b16 %v572, %v570
      %v627 = vpack.c.b16 %v573, %v571
      %v628 = vpack.c.b16 %v576, %v574
      %v629 = vpack.c.b16 %v577, %v575
      %v630 = vpack.c.b16 %v580, %v578
      %v631 = vpack.c.b16 %v581, %v579
      %v632 = vpack.c.b16 %v584, %v582
      %v633 = vpack.c.b16 %v585, %v583
      %v634 = vpack.c.b16 %v588, %v586
      %v635 = vpack.c.b16 %v589, %v587
      %v636 = vpack.c.b16 %v592, %v590
      %v637 = vpack.c.b16 %v593, %v591
      %v638 = vpack.c.b16 %v596, %v594
      %v639 = vpack.c.b16 %v597, %v595
      %v640 = vpack.c.b16 %v600, %v598
      %v641 = vpack.c.b16 %v601, %v599
      %v642 = vpack.c.b16 %v604, %v602
      %v643 = vpack.c.b16 %v605, %v603
      %v644 = vpack.c.b16 %v608, %v606
      %v645 = vpack.c.b16 %v609, %v607
      %v646 = vpack.c.b16 %v612, %v610
      %v647 = vpack.c.b16 %v613, %v611
      %v648 = vpack.c.b16 %v616, %v614
      %v649 = vpack.c.b16 %v617, %v615
      %682 = vmatprep.subr.bf16.mxu0 %v619
      %683 = vmatpush1.bf16.msra.mxu0 %v618
      %684 = vmatprep.subr.bf16.mxu0 %v621
      %685 = vmatpush1.bf16.msra.mxu0 %v620
      %686 = vmatprep.subr.bf16.mxu0 %v623
      %687 = vmatpush1.bf16.msra.mxu0 %v622
      %688 = vmatprep.subr.bf16.mxu0 %v625
      %689 = vmatpush1.bf16.msra.mxu0 %v624
      %690 = vmatprep.subr.bf16.mxu0 %v627
      %691 = vmatpush1.bf16.msra.mxu0 %v626
      %692 = vmatprep.subr.bf16.mxu0 %v629
      %693 = vmatpush1.bf16.msra.mxu0 %v628
      %694 = vmatprep.subr.bf16.mxu0 %v631
      %695 = vmatpush1.bf16.msra.mxu0 %v630
      %696 = vmatprep.subr.bf16.mxu0 %v633
      %697 = vmatpush1.bf16.msra.mxu0 %v632
      %698 = vmatprep.subr.bf16.mxu0 %v635
      %699 = vmatpush1.bf16.msra.mxu0 %v634
      %700 = vmatprep.subr.bf16.mxu0 %v637
      %701 = vmatpush1.bf16.msra.mxu0 %v636
      %702 = vmatprep.subr.bf16.mxu0 %v639
      %703 = vmatpush1.bf16.msra.mxu0 %v638
      %704 = vmatprep.subr.bf16.mxu0 %v641
      %705 = vmatpush1.bf16.msra.mxu0 %v640
      %706 = vmatprep.subr.bf16.mxu0 %v643
      %707 = vmatpush1.bf16.msra.mxu0 %v642
      %708 = vmatprep.subr.bf16.mxu0 %v645
      %709 = vmatpush1.bf16.msra.mxu0 %v644
      %710 = vmatprep.subr.bf16.mxu0 %v647
      %711 = vmatpush1.bf16.msra.mxu0 %v646
      %712 = vmatprep.subr.bf16.mxu0 %v649
      %713 = vmatpush1.bf16.msra.mxu0 %v648
      %714 = vmatprep.mubr.bf16.mxu0 %v459
      %715 = vmatmul.mubr.bf16.gmra.mrb[0].mxu0 %v458
      %v716 = vpop.f32.mrb[0].mxu0
      %v717 = vadd.f32 %v355, %v716
      %v718 = vpop.f32.mrb[0].mxu0
      %v719 = vadd.f32 %v359, %v718
      %v720 = vpop.f32.mrb[0].mxu0
      %v721 = vadd.f32 %v355, %v720
      %v722 = vpop.f32.mrb[0].mxu0
      %v723 = vadd.f32 %v359, %v722
      %724 = vmatprep.mubr.bf16.mxu0 %v461
      %725 = vmatmul.mubr.bf16.gmra.mrb[0].mxu0 %v460
      %v726 = vpop.f32.mrb[0].mxu0
      %v727 = vadd.f32 %v355, %v726
      %v728 = vpop.f32.mrb[0].mxu0
      %v729 = vadd.f32 %v359, %v728
      %v730 = vpop.f32.mrb[0].mxu0
      %v731 = vadd.f32 %v355, %v730
      %v732 = vpop.f32.mrb[0].mxu0
      %v733 = vadd.f32 %v359, %v732
      %734 = vmatprep.mubr.bf16.mxu0 %v463
      %735 = vmatmul.mubr.bf16.gmra.mrb[0].mxu0 %v462
      %v736 = vpop.f32.mrb[0].mxu0
      %v737 = vadd.f32 %v355, %v736
      %v738 = vpop.f32.mrb[0].mxu0
      %v739 = vadd.f32 %v359, %v738
      %v740 = vpop.f32.mrb[0].mxu0
      %v741 = vadd.f32 %v355, %v740
      %v742 = vpop.f32.mrb[0].mxu0
      %v743 = vadd.f32 %v359, %v742
      %744 = vmatprep.mubr.bf16.mxu0 %v465
      %745 = vmatmul.mubr.bf16.gmra.mrb[0].mxu0 %v464
      %v746 = vpop.f32.mrb[0].mxu0
      %v747 = vadd.f32 %v355, %v746
      %v748 = vpop.f32.mrb[0].mxu0
      %v749 = vadd.f32 %v359, %v748
      %v750 = vpop.f32.mrb[0].mxu0
      %v751 = vadd.f32 %v355, %v750
      %v752 = vpop.f32.mrb[0].mxu0
      %v753 = vadd.f32 %v359, %v752
      %754 = vmatprep.mubr.bf16.mxu0 %v467
      %755 = vmatmul.mubr.bf16.gmra.mrb[0].mxu0 %v466
      %v756 = vpop.f32.mrb[0].mxu0
      %v757 = vadd.f32 %v355, %v756
      %v758 = vpop.f32.mrb[0].mxu0
      %v759 = vadd.f32 %v359, %v758
      %v760 = vpop.f32.mrb[0].mxu0
      %v761 = vadd.f32 %v355, %v760
      %v762 = vpop.f32.mrb[0].mxu0
      %v763 = vadd.f32 %v359, %v762
      %764 = vmatprep.mubr.bf16.mxu0 %v469
      %765 = vmatmul.mubr.bf16.gmra.mrb[0].mxu0 %v468
      %v766 = vpop.f32.mrb[0].mxu0
      %v767 = vadd.f32 %v355, %v766
      %v768 = vpop.f32.mrb[0].mxu0
      %v769 = vadd.f32 %v359, %v768
      %v770 = vpop.f32.mrb[0].mxu0
      %v771 = vadd.f32 %v355, %v770
      %v772 = vpop.f32.mrb[0].mxu0
      %v773 = vadd.f32 %v359, %v772
      %774 = vmatprep.mubr.bf16.mxu0 %v471
      %775 = vmatmul.mubr.bf16.gmra.mrb[0].mxu0 %v470
      %v776 = vpop.f32.mrb[0].mxu0
      %v777 = vadd.f32 %v355, %v776
      %v778 = vpop.f32.mrb[0].mxu0
      %v779 = vadd.f32 %v359, %v778
      %v780 = vpop.f32.mrb[0].mxu0
      %v781 = vadd.f32 %v355, %v780
      %v782 = vpop.f32.mrb[0].mxu0
      %v783 = vadd.f32 %v359, %v782
      %784 = vmatprep.mubr.bf16.mxu0 %v473
      %785 = vmatmul.mubr.bf16.gmra.mrb[0].mxu0 %v472
      %v786 = vpop.f32.mrb[0].mxu0
      %v787 = vadd.f32 %v355, %v786
      %v788 = vpop.f32.mrb[0].mxu0
      %v789 = vadd.f32 %v359, %v788
      %v790 = vpop.f32.mrb[0].mxu0
      %v791 = vadd.f32 %v355, %v790
      %v792 = vpop.f32.mrb[0].mxu0
      %v793 = vadd.f32 %v359, %v792
      %794 = vmatprep.mubr.bf16.mxu0 %v475
      %795 = vmatmul.mubr.bf16.gmra.mrb[0].mxu0 %v474
      %v796 = vpop.f32.mrb[0].mxu0
      %v797 = vadd.f32 %v355, %v796
      %v798 = vpop.f32.mrb[0].mxu0
      %v799 = vadd.f32 %v359, %v798
      %v800 = vpop.f32.mrb[0].mxu0
      %v801 = vadd.f32 %v355, %v800
      %v802 = vpop.f32.mrb[0].mxu0
      %v803 = vadd.f32 %v359, %v802
      %804 = vmatprep.mubr.bf16.mxu0 %v477
      %805 = vmatmul.mubr.bf16.gmra.mrb[0].mxu0 %v476
      %v806 = vpop.f32.mrb[0].mxu0
      %v807 = vadd.f32 %v355, %v806
      %v808 = vpop.f32.mrb[0].mxu0
      %v809 = vadd.f32 %v359, %v808
      %v810 = vpop.f32.mrb[0].mxu0
      %v811 = vadd.f32 %v355, %v810
      %v812 = vpop.f32.mrb[0].mxu0
      %v813 = vadd.f32 %v359, %v812
      %814 = vmatprep.mubr.bf16.mxu0 %v479
      %815 = vmatmul.mubr.bf16.gmra.mrb[0].mxu0 %v478
      %v816 = vpop.f32.mrb[0].mxu0
      %v817 = vadd.f32 %v355, %v816
      %v818 = vpop.f32.mrb[0].mxu0
      %v819 = vadd.f32 %v359, %v818
      %v820 = vpop.f32.mrb[0].mxu0
      %v821 = vadd.f32 %v355, %v820
      %v822 = vpop.f32.mrb[0].mxu0
      %v823 = vadd.f32 %v359, %v822
      %824 = vmatprep.mubr.bf16.mxu0 %v481
      %825 = vmatmul.mubr.bf16.gmra.mrb[0].mxu0 %v480
      %v826 = vpop.f32.mrb[0].mxu0
      %v827 = vadd.f32 %v355, %v826
      %v828 = vpop.f32.mrb[0].mxu0
      %v829 = vadd.f32 %v359, %v828
      %v830 = vpop.f32.mrb[0].mxu0
      %v831 = vadd.f32 %v355, %v830
      %v832 = vpop.f32.mrb[0].mxu0
      %v833 = vadd.f32 %v359, %v832
      %834 = vmatprep.mubr.bf16.mxu0 %v483
      %835 = vmatmul.mubr.bf16.gmra.mrb[0].mxu0 %v482
      %v836 = vpop.f32.mrb[0].mxu0
      %v837 = vadd.f32 %v355, %v836
      %v838 = vpop.f32.mrb[0].mxu0
      %v839 = vadd.f32 %v359, %v838
      %v840 = vpop.f32.mrb[0].mxu0
      %v841 = vadd.f32 %v355, %v840
      %v842 = vpop.f32.mrb[0].mxu0
      %v843 = vadd.f32 %v359, %v842
      %844 = vmatprep.mubr.bf16.mxu0 %v485
      %845 = vmatmul.mubr.bf16.gmra.mrb[0].mxu0 %v484
      %v846 = vpop.f32.mrb[0].mxu0
      %v847 = vadd.f32 %v355, %v846
      %v848 = vpop.f32.mrb[0].mxu0
      %v849 = vadd.f32 %v359, %v848
      %v850 = vpop.f32.mrb[0].mxu0
      %v851 = vadd.f32 %v355, %v850
      %v852 = vpop.f32.mrb[0].mxu0
      %v853 = vadd.f32 %v359, %v852
      %854 = vmatprep.mubr.bf16.mxu0 %v487
      %855 = vmatmul.mubr.bf16.gmra.mrb[0].mxu0 %v486
      %v856 = vpop.f32.mrb[0].mxu0
      %v857 = vadd.f32 %v355, %v856
      %v858 = vpop.f32.mrb[0].mxu0
      %v859 = vadd.f32 %v359, %v858
      %v860 = vpop.f32.mrb[0].mxu0
      %v861 = vadd.f32 %v355, %v860
      %v862 = vpop.f32.mrb[0].mxu0
      %v863 = vadd.f32 %v359, %v862
      %864 = vmatprep.mubr.bf16.mxu0 %v489
      %865 = vmatmul.mubr.bf16.gmra.mrb[0].mxu0 %v488
      %v866 = vpop.f32.mrb[0].mxu0
      %v867 = vadd.f32 %v355, %v866
      %v868 = vpop.f32.mrb[0].mxu0
      %v869 = vadd.f32 %v359, %v868
      %v870 = vpop.f32.mrb[0].mxu0
      %v871 = vadd.f32 %v355, %v870
      %v872 = vpop.f32.mrb[0].mxu0
      %v873 = vadd.f32 %v359, %v872
      %874 = vdwg.mxu0
      %v875 = vmul.f32 %v717, 0.01
      %v876 = vmul.f32 %v719, 0.01
      %v877 = vmul.f32 %v721, 0.01
      %v878 = vmul.f32 %v723, 0.01
      %v879 = vmul.f32 %v727, 0.01
      %v880 = vmul.f32 %v729, 0.01
      %v881 = vmul.f32 %v731, 0.01
      %v882 = vmul.f32 %v733, 0.01
      %v883 = vmul.f32 %v737, 0.01
      %v884 = vmul.f32 %v739, 0.01
      %v885 = vmul.f32 %v741, 0.01
      %v886 = vmul.f32 %v743, 0.01
      %v887 = vmul.f32 %v747, 0.01
      %v888 = vmul.f32 %v749, 0.01
      %v889 = vmul.f32 %v751, 0.01
      %v890 = vmul.f32 %v753, 0.01
      %v891 = vmul.f32 %v757, 0.01
      %v892 = vmul.f32 %v759, 0.01
      %v893 = vmul.f32 %v761, 0.01
      %v894 = vmul.f32 %v763, 0.01
      %v895 = vmul.f32 %v767, 0.01
      %v896 = vmul.f32 %v769, 0.01
      %v897 = vmul.f32 %v771, 0.01
      %v898 = vmul.f32 %v773, 0.01
      %v899 = vmul.f32 %v777, 0.01
      %v900 = vmul.f32 %v779, 0.01
      %v901 = vmul.f32 %v781, 0.01
      %v902 = vmul.f32 %v783, 0.01
      %v903 = vmul.f32 %v787, 0.01
      %v904 = vmul.f32 %v789, 0.01
      %v905 = vmul.f32 %v791, 0.01
      %v906 = vmul.f32 %v793, 0.01
      %v907 = vmul.f32 %v797, 0.01
      %v908 = vmul.f32 %v799, 0.01
      %v909 = vmul.f32 %v801, 0.01
      %v910 = vmul.f32 %v803, 0.01
      %v911 = vmul.f32 %v807, 0.01
      %v912 = vmul.f32 %v809, 0.01
      %v913 = vmul.f32 %v811, 0.01
      %v914 = vmul.f32 %v813, 0.01
      %v915 = vmul.f32 %v817, 0.01
      %v916 = vmul.f32 %v819, 0.01
      %v917 = vmul.f32 %v821, 0.01
      %v918 = vmul.f32 %v823, 0.01
      %v919 = vmul.f32 %v827, 0.01
      %v920 = vmul.f32 %v829, 0.01
      %v921 = vmul.f32 %v831, 0.01
      %v922 = vmul.f32 %v833, 0.01
      %v923 = vmul.f32 %v837, 0.01
      %v924 = vmul.f32 %v839, 0.01
      %v925 = vmul.f32 %v841, 0.01
      %v926 = vmul.f32 %v843, 0.01
      %v927 = vmul.f32 %v847, 0.01
      %v928 = vmul.f32 %v849, 0.01
      %v929 = vmul.f32 %v851, 0.01
      %v930 = vmul.f32 %v853, 0.01
      %v931 = vmul.f32 %v857, 0.01
      %v932 = vmul.f32 %v859, 0.01
      %v933 = vmul.f32 %v861, 0.01
      %v934 = vmul.f32 %v863, 0.01
      %v935 = vmul.f32 %v867, 0.01
      %v936 = vmul.f32 %v869, 0.01
      %v937 = vmul.f32 %v871, 0.01
      %v938 = vmul.f32 %v873, 0.01
      %v939 = vmax.f32 %v717, %v875
      %v940 = vmax.f32 %v719, %v876
      %v941 = vmax.f32 %v721, %v877
      %v942 = vmax.f32 %v723, %v878
      %v943 = vmax.f32 %v727, %v879
      %v944 = vmax.f32 %v729, %v880
      %v945 = vmax.f32 %v731, %v881
      %v946 = vmax.f32 %v733, %v882
      %v947 = vmax.f32 %v737, %v883
      %v948 = vmax.f32 %v739, %v884
      %v949 = vmax.f32 %v741, %v885
      %v950 = vmax.f32 %v743, %v886
      %v951 = vmax.f32 %v747, %v887
      %v952 = vmax.f32 %v749, %v888
      %v953 = vmax.f32 %v751, %v889
      %v954 = vmax.f32 %v753, %v890
      %v955 = vmax.f32 %v757, %v891
      %v956 = vmax.f32 %v759, %v892
      %v957 = vmax.f32 %v761, %v893
      %v958 = vmax.f32 %v763, %v894
      %v959 = vmax.f32 %v767, %v895
      %v960 = vmax.f32 %v769, %v896
      %v961 = vmax.f32 %v771, %v897
      %v962 = vmax.f32 %v773, %v898
      %v963 = vmax.f32 %v777, %v899
      %v964 = vmax.f32 %v779, %v900
      %v965 = vmax.f32 %v781, %v901
      %v966 = vmax.f32 %v783, %v902
      %v967 = vmax.f32 %v787, %v903
      %v968 = vmax.f32 %v789, %v904
      %v969 = vmax.f32 %v791, %v905
      %v970 = vmax.f32 %v793, %v906
      %v971 = vmax.f32 %v797, %v907
      %v972 = vmax.f32 %v799, %v908
      %v973 = vmax.f32 %v801, %v909
      %v974 = vmax.f32 %v803, %v910
      %v975 = vmax.f32 %v807, %v911
      %v976 = vmax.f32 %v809, %v912
      %v977 = vmax.f32 %v811, %v913
      %v978 = vmax.f32 %v813, %v914
      %v979 = vmax.f32 %v817, %v915
      %v980 = vmax.f32 %v819, %v916
      %v981 = vmax.f32 %v821, %v917
      %v982 = vmax.f32 %v823, %v918
      %v983 = vmax.f32 %v827, %v919
      %v984 = vmax.f32 %v829, %v920
      %v985 = vmax.f32 %v831, %v921
      %v986 = vmax.f32 %v833, %v922
      %v987 = vmax.f32 %v837, %v923
      %v988 = vmax.f32 %v839, %v924
      %v989 = vmax.f32 %v841, %v925
      %v990 = vmax.f32 %v843, %v926
      %v991 = vmax.f32 %v847, %v927
      %v992 = vmax.f32 %v849, %v928
      %v993 = vmax.f32 %v851, %v929
      %v994 = vmax.f32 %v853, %v930
      %v995 = vmax.f32 %v857, %v931
      %v996 = vmax.f32 %v859, %v932
      %v997 = vmax.f32 %v861, %v933
      %v998 = vmax.f32 %v863, %v934
      %v999 = vmax.f32 %v867, %v935
      %v1000 = vmax.f32 %v869, %v936
      %v1001 = vmax.f32 %v871, %v937
      %v1002 = vmax.f32 %v873, %v938
      %v1003 = vpack.c.bf16 %v941, %v939
      %v1004 = vpack.c.bf16 %v942, %v940
      %v1005 = vpack.c.bf16 %v945, %v943
      %v1006 = vpack.c.bf16 %v946, %v944
      %v1007 = vpack.c.bf16 %v949, %v947
      %v1008 = vpack.c.bf16 %v950, %v948
      %v1009 = vpack.c.bf16 %v953, %v951
      %v1010 = vpack.c.bf16 %v954, %v952
      %v1011 = vpack.c.bf16 %v957, %v955
      %v1012 = vpack.c.bf16 %v958, %v956
      %v1013 = vpack.c.bf16 %v961, %v959
      %v1014 = vpack.c.bf16 %v962, %v960
      %v1015 = vpack.c.bf16 %v965, %v963
      %v1016 = vpack.c.bf16 %v966, %v964
      %v1017 = vpack.c.bf16 %v969, %v967
      %v1018 = vpack.c.bf16 %v970, %v968
      %v1019 = vpack.c.bf16 %v973, %v971
      %v1020 = vpack.c.bf16 %v974, %v972
      %v1021 = vpack.c.bf16 %v977, %v975
      %v1022 = vpack.c.bf16 %v978, %v976
      %v1023 = vpack.c.bf16 %v981, %v979
      %v1024 = vpack.c.bf16 %v982, %v980
      %v1025 = vpack.c.bf16 %v985, %v983
      %v1026 = vpack.c.bf16 %v986, %v984
      %v1027 = vpack.c.bf16 %v989, %v987
      %v1028 = vpack.c.bf16 %v990, %v988
      %v1029 = vpack.c.bf16 %v993, %v991
      %v1030 = vpack.c.bf16 %v994, %v992
      %v1031 = vpack.c.bf16 %v997, %v995
      %v1032 = vpack.c.bf16 %v998, %v996
      %v1033 = vpack.c.bf16 %v1001, %v999
      %v1034 = vpack.c.bf16 %v1002, %v1000
      %v1035 = vld [vmem:[%s3] sm:$0xf]
      %v1036 = vld [vmem:[%s3 + $0x4] sm:$0xf]
      %v1037 = vld [vmem:[%s3 + $0x8] sm:$0xf]
      %v1038 = vld [vmem:[%s3 + $0xc] sm:$0xf]
      %v1039 = vld [vmem:[%s3 + $0x10] sm:$0xf]
      %v1040 = vld [vmem:[%s3 + $0x14] sm:$0xf]
      %v1041 = vld [vmem:[%s3 + $0x18] sm:$0xf]
      %v1042 = vld [vmem:[%s3 + $0x1c] sm:$0xf]
      %v1043 = vld [vmem:[%s3 + $0x20] sm:$0xf]
      %v1044 = vld [vmem:[%s3 + $0x24] sm:$0xf]
      %v1045 = vld [vmem:[%s3 + $0x28] sm:$0xf]
      %v1046 = vld [vmem:[%s3 + $0x2c] sm:$0xf]
      %v1047 = vld [vmem:[%s3 + $0x30] sm:$0xf]
      %v1048 = vld [vmem:[%s3 + $0x34] sm:$0xf]
      %v1049 = vld [vmem:[%s3 + $0x38] sm:$0xf]
      %v1050 = vld [vmem:[%s3 + $0x3c] sm:$0xf]
      %v1051 = vld [vmem:[%s3 + $0x40] sm:$0xf]
      %v1052 = vld [vmem:[%s3 + $0x44] sm:$0xf]
      %v1053 = vld [vmem:[%s3 + $0x48] sm:$0xf]
      %v1054 = vld [vmem:[%s3 + $0x4c] sm:$0xf]
      %v1055 = vld [vmem:[%s3 + $0x50] sm:$0xf]
      %v1056 = vld [vmem:[%s3 + $0x54] sm:$0xf]
      %v1057 = vld [vmem:[%s3 + $0x58] sm:$0xf]
      %v1058 = vld [vmem:[%s3 + $0x5c] sm:$0xf]
      %v1059 = vld [vmem:[%s3 + $0x60] sm:$0xf]
      %v1060 = vld [vmem:[%s3 + $0x64] sm:$0xf]
      %v1061 = vld [vmem:[%s3 + $0x68] sm:$0xf]
      %v1062 = vld [vmem:[%s3 + $0x6c] sm:$0xf]
      %v1063 = vld [vmem:[%s3 + $0x70] sm:$0xf]
      %v1064 = vld [vmem:[%s3 + $0x74] sm:$0xf]
      %v1065 = vld [vmem:[%s3 + $0x78] sm:$0xf]
      %v1066 = vld [vmem:[%s3 + $0x7c] sm:$0xf]
      %v1067 = vld [vmem:[%s4] sm:$0x1]
      %v1069 = vlaneseq
      %v1070 = vshrl.u32 %v1069, 7
      %v1071 = vsub.s32 0, %v1070
      %v1072 = vrot.slane %v1067, %v1071
      %v1106 = vunpack.c.l.b16 %v1035
      %v1107 = vunpack.c.l.b16 %v1036
      %v1108 = vunpack.c.l.b16 %v1037
      %v1109 = vunpack.c.l.b16 %v1038
      %v1110 = vunpack.c.l.b16 %v1039
      %v1111 = vunpack.c.l.b16 %v1040
      %v1112 = vunpack.c.l.b16 %v1041
      %v1113 = vunpack.c.l.b16 %v1042
      %v1114 = vunpack.c.l.b16 %v1043
      %v1115 = vunpack.c.l.b16 %v1044
      %v1116 = vunpack.c.l.b16 %v1045
      %v1117 = vunpack.c.l.b16 %v1046
      %v1118 = vunpack.c.l.b16 %v1047
      %v1119 = vunpack.c.l.b16 %v1048
      %v1120 = vunpack.c.l.b16 %v1049
      %v1121 = vunpack.c.l.b16 %v1050
      %v1122 = vunpack.c.l.b16 %v1051
      %v1123 = vunpack.c.l.b16 %v1052
      %v1124 = vunpack.c.l.b16 %v1053
      %v1125 = vunpack.c.l.b16 %v1054
      %v1126 = vunpack.c.l.b16 %v1055
      %v1127 = vunpack.c.l.b16 %v1056
      %v1128 = vunpack.c.l.b16 %v1057
      %v1129 = vunpack.c.l.b16 %v1058
      %v1130 = vunpack.c.l.b16 %v1059
      %v1131 = vunpack.c.l.b16 %v1060
      %v1132 = vunpack.c.l.b16 %v1061
      %v1133 = vunpack.c.l.b16 %v1062
      %v1134 = vunpack.c.l.b16 %v1063
      %v1135 = vunpack.c.l.b16 %v1064
      %v1136 = vunpack.c.l.b16 %v1065
      %v1137 = vunpack.c.l.b16 %v1066
      %v1138 = vpack.c.b16 %v1107, %v1106
      %v1139 = vpack.c.b16 %v1109, %v1108
      %v1140 = vpack.c.b16 %v1111, %v1110
      %v1141 = vpack.c.b16 %v1113, %v1112
      %v1142 = vpack.c.b16 %v1115, %v1114
      %v1143 = vpack.c.b16 %v1117, %v1116
      %v1144 = vpack.c.b16 %v1119, %v1118
      %v1145 = vpack.c.b16 %v1121, %v1120
      %v1146 = vpack.c.b16 %v1123, %v1122
      %v1147 = vpack.c.b16 %v1125, %v1124
      %v1148 = vpack.c.b16 %v1127, %v1126
      %v1149 = vpack.c.b16 %v1129, %v1128
      %v1150 = vpack.c.b16 %v1131, %v1130
      %v1151 = vpack.c.b16 %v1133, %v1132
      %v1152 = vpack.c.b16 %v1135, %v1134
      %v1153 = vpack.c.b16 %v1137, %v1136
      %1170 = vmatprep.subr.bf16.mxu0 0
      %1171 = vmatpush1.bf16.msra.mxu0 %v1138
      %1172 = vmatprep.subr.bf16.mxu0 0
      %1173 = vmatpush1.bf16.msra.mxu0 %v1139
      %1174 = vmatprep.subr.bf16.mxu0 0
      %1175 = vmatpush1.bf16.msra.mxu0 %v1140
      %1176 = vmatprep.subr.bf16.mxu0 0
      %1177 = vmatpush1.bf16.msra.mxu0 %v1141
      %1178 = vmatprep.subr.bf16.mxu0 0
      %1179 = vmatpush1.bf16.msra.mxu0 %v1142
      %1180 = vmatprep.subr.bf16.mxu0 0
      %1181 = vmatpush1.bf16.msra.mxu0 %v1143
      %1182 = vmatprep.subr.bf16.mxu0 0
      %1183 = vmatpush1.bf16.msra.mxu0 %v1144
      %1184 = vmatprep.subr.bf16.mxu0 0
      %1185 = vmatpush1.bf16.msra.mxu0 %v1145
      %1186 = vmatprep.subr.bf16.mxu0 0
      %1187 = vmatpush1.bf16.msra.mxu0 %v1146
      %1188 = vmatprep.subr.bf16.mxu0 0
      %1189 = vmatpush1.bf16.msra.mxu0 %v1147
      %1190 = vmatprep.subr.bf16.mxu0 0
      %1191 = vmatpush1.bf16.msra.mxu0 %v1148
      %1192 = vmatprep.subr.bf16.mxu0 0
      %1193 = vmatpush1.bf16.msra.mxu0 %v1149
      %1194 = vmatprep.subr.bf16.mxu0 0
      %1195 = vmatpush1.bf16.msra.mxu0 %v1150
      %1196 = vmatprep.subr.bf16.mxu0 0
      %1197 = vmatpush1.bf16.msra.mxu0 %v1151
      %1198 = vmatprep.subr.bf16.mxu0 0
      %1199 = vmatpush1.bf16.msra.mxu0 %v1152
      %1200 = vmatprep.subr.bf16.mxu0 0
      %1201 = vmatpush1.bf16.msra.mxu0 %v1153
      %1202 = vmatprep.mubr.bf16.mxu0 %v1004
      %1203 = vmatmul.mubr.bf16.gmra.mrb[0].mxu0 %v1003
      %v1204 = vpop.f32.mrb[0].mxu0
      %v1205 = vadd.f32 %v1072, %v1204
      %v1206 = vpop.f32.mrb[0].mxu0
      %v1207 = vpop.f32.mrb[0].mxu0
      %v1208 = vadd.f32 %v1072, %v1207
      %v1209 = vpop.f32.mrb[0].mxu0
      %1210 = vmatprep.mubr.bf16.mxu0 %v1006
      %1211 = vmatmul.mubr.bf16.gmra.mrb[0].mxu0 %v1005
      %v1212 = vpop.f32.mrb[0].mxu0
      %v1213 = vadd.f32 %v1072, %v1212
      %v1214 = vpop.f32.mrb[0].mxu0
      %v1215 = vpop.f32.mrb[0].mxu0
      %v1216 = vadd.f32 %v1072, %v1215
      %v1217 = vpop.f32.mrb[0].mxu0
      %1218 = vmatprep.mubr.bf16.mxu0 %v1008
      %1219 = vmatmul.mubr.bf16.gmra.mrb[0].mxu0 %v1007
      %v1220 = vpop.f32.mrb[0].mxu0
      %v1221 = vadd.f32 %v1072, %v1220
      %v1222 = vpop.f32.mrb[0].mxu0
      %v1223 = vpop.f32.mrb[0].mxu0
      %v1224 = vadd.f32 %v1072, %v1223
      %v1225 = vpop.f32.mrb[0].mxu0
      %1226 = vmatprep.mubr.bf16.mxu0 %v1010
      %1227 = vmatmul.mubr.bf16.gmra.mrb[0].mxu0 %v1009
      %v1228 = vpop.f32.mrb[0].mxu0
      %v1229 = vadd.f32 %v1072, %v1228
      %v1230 = vpop.f32.mrb[0].mxu0
      %v1231 = vpop.f32.mrb[0].mxu0
      %v1232 = vadd.f32 %v1072, %v1231
      %v1233 = vpop.f32.mrb[0].mxu0
      %1234 = vmatprep.mubr.bf16.mxu0 %v1012
      %1235 = vmatmul.mubr.bf16.gmra.mrb[0].mxu0 %v1011
      %v1236 = vpop.f32.mrb[0].mxu0
      %v1237 = vadd.f32 %v1072, %v1236
      %v1238 = vpop.f32.mrb[0].mxu0
      %v1239 = vpop.f32.mrb[0].mxu0
      %v1240 = vadd.f32 %v1072, %v1239
      %v1241 = vpop.f32.mrb[0].mxu0
      %1242 = vmatprep.mubr.bf16.mxu0 %v1014
      %1243 = vmatmul.mubr.bf16.gmra.mrb[0].mxu0 %v1013
      %v1244 = vpop.f32.mrb[0].mxu0
      %v1245 = vadd.f32 %v1072, %v1244
      %v1246 = vpop.f32.mrb[0].mxu0
      %v1247 = vpop.f32.mrb[0].mxu0
      %v1248 = vadd.f32 %v1072, %v1247
      %v1249 = vpop.f32.mrb[0].mxu0
      %1250 = vmatprep.mubr.bf16.mxu0 %v1016
      %1251 = vmatmul.mubr.bf16.gmra.mrb[0].mxu0 %v1015
      %v1252 = vpop.f32.mrb[0].mxu0
      %v1253 = vadd.f32 %v1072, %v1252
      %v1254 = vpop.f32.mrb[0].mxu0
      %v1255 = vpop.f32.mrb[0].mxu0
      %v1256 = vadd.f32 %v1072, %v1255
      %v1257 = vpop.f32.mrb[0].mxu0
      %1258 = vmatprep.mubr.bf16.mxu0 %v1018
      %1259 = vmatmul.mubr.bf16.gmra.mrb[0].mxu0 %v1017
      %v1260 = vpop.f32.mrb[0].mxu0
      %v1261 = vadd.f32 %v1072, %v1260
      %v1262 = vpop.f32.mrb[0].mxu0
      %v1263 = vpop.f32.mrb[0].mxu0
      %v1264 = vadd.f32 %v1072, %v1263
      %v1265 = vpop.f32.mrb[0].mxu0
      %1266 = vmatprep.mubr.bf16.mxu0 %v1020
      %1267 = vmatmul.mubr.bf16.gmra.mrb[0].mxu0 %v1019
      %v1268 = vpop.f32.mrb[0].mxu0
      %v1269 = vadd.f32 %v1072, %v1268
      %v1270 = vpop.f32.mrb[0].mxu0
      %v1271 = vpop.f32.mrb[0].mxu0
      %v1272 = vadd.f32 %v1072, %v1271
      %v1273 = vpop.f32.mrb[0].mxu0
      %1274 = vmatprep.mubr.bf16.mxu0 %v1022
      %1275 = vmatmul.mubr.bf16.gmra.mrb[0].mxu0 %v1021
      %v1276 = vpop.f32.mrb[0].mxu0
      %v1277 = vadd.f32 %v1072, %v1276
      %v1278 = vpop.f32.mrb[0].mxu0
      %v1279 = vpop.f32.mrb[0].mxu0
      %v1280 = vadd.f32 %v1072, %v1279
      %v1281 = vpop.f32.mrb[0].mxu0
      %1282 = vmatprep.mubr.bf16.mxu0 %v1024
      %1283 = vmatmul.mubr.bf16.gmra.mrb[0].mxu0 %v1023
      %v1284 = vpop.f32.mrb[0].mxu0
      %v1285 = vadd.f32 %v1072, %v1284
      %v1286 = vpop.f32.mrb[0].mxu0
      %v1287 = vpop.f32.mrb[0].mxu0
      %v1288 = vadd.f32 %v1072, %v1287
      %v1289 = vpop.f32.mrb[0].mxu0
      %1290 = vmatprep.mubr.bf16.mxu0 %v1026
      %1291 = vmatmul.mubr.bf16.gmra.mrb[0].mxu0 %v1025
      %v1292 = vpop.f32.mrb[0].mxu0
      %v1293 = vadd.f32 %v1072, %v1292
      %v1294 = vpop.f32.mrb[0].mxu0
      %v1295 = vpop.f32.mrb[0].mxu0
      %v1296 = vadd.f32 %v1072, %v1295
      %v1297 = vpop.f32.mrb[0].mxu0
      %1298 = vmatprep.mubr.bf16.mxu0 %v1028
      %1299 = vmatmul.mubr.bf16.gmra.mrb[0].mxu0 %v1027
      %v1300 = vpop.f32.mrb[0].mxu0
      %v1301 = vadd.f32 %v1072, %v1300
      %v1302 = vpop.f32.mrb[0].mxu0
      %v1303 = vpop.f32.mrb[0].mxu0
      %v1304 = vadd.f32 %v1072, %v1303
      %v1305 = vpop.f32.mrb[0].mxu0
      %1306 = vmatprep.mubr.bf16.mxu0 %v1030
      %1307 = vmatmul.mubr.bf16.gmra.mrb[0].mxu0 %v1029
      %v1308 = vpop.f32.mrb[0].mxu0
      %v1309 = vadd.f32 %v1072, %v1308
      %v1310 = vpop.f32.mrb[0].mxu0
      %v1311 = vpop.f32.mrb[0].mxu0
      %v1312 = vadd.f32 %v1072, %v1311
      %v1313 = vpop.f32.mrb[0].mxu0
      %1314 = vmatprep.mubr.bf16.mxu0 %v1032
      %1315 = vmatmul.mubr.bf16.gmra.mrb[0].mxu0 %v1031
      %v1316 = vpop.f32.mrb[0].mxu0
      %v1317 = vadd.f32 %v1072, %v1316
      %v1318 = vpop.f32.mrb[0].mxu0
      %v1319 = vpop.f32.mrb[0].mxu0
      %v1320 = vadd.f32 %v1072, %v1319
      %v1321 = vpop.f32.mrb[0].mxu0
      %1322 = vmatprep.mubr.bf16.mxu0 %v1034
      %1323 = vmatmul.mubr.bf16.gmra.mrb[0].mxu0 %v1033
      %v1324 = vpop.f32.mrb[0].mxu0
      %v1325 = vadd.f32 %v1072, %v1324
      %v1326 = vpop.f32.mrb[0].mxu0
      %v1327 = vpop.f32.mrb[0].mxu0
      %v1328 = vadd.f32 %v1072, %v1327
      %v1329 = vpop.f32.mrb[0].mxu0
      %1330 = vdwg.mxu0
      %v1331 = vmul.f32 %v1205, 0.01
      %v1332 = vmul.f32 %v1208, 0.01
      %v1333 = vmul.f32 %v1213, 0.01
      %v1334 = vmul.f32 %v1216, 0.01
      %v1335 = vmul.f32 %v1221, 0.01
      %v1336 = vmul.f32 %v1224, 0.01
      %v1337 = vmul.f32 %v1229, 0.01
      %v1338 = vmul.f32 %v1232, 0.01
      %v1339 = vmul.f32 %v1237, 0.01
      %v1340 = vmul.f32 %v1240, 0.01
      %v1341 = vmul.f32 %v1245, 0.01
      %v1342 = vmul.f32 %v1248, 0.01
      %v1343 = vmul.f32 %v1253, 0.01
      %v1344 = vmul.f32 %v1256, 0.01
      %v1345 = vmul.f32 %v1261, 0.01
      %v1346 = vmul.f32 %v1264, 0.01
      %v1347 = vmul.f32 %v1269, 0.01
      %v1348 = vmul.f32 %v1272, 0.01
      %v1349 = vmul.f32 %v1277, 0.01
      %v1350 = vmul.f32 %v1280, 0.01
      %v1351 = vmul.f32 %v1285, 0.01
      %v1352 = vmul.f32 %v1288, 0.01
      %v1353 = vmul.f32 %v1293, 0.01
      %v1354 = vmul.f32 %v1296, 0.01
      %v1355 = vmul.f32 %v1301, 0.01
      %v1356 = vmul.f32 %v1304, 0.01
      %v1357 = vmul.f32 %v1309, 0.01
      %v1358 = vmul.f32 %v1312, 0.01
      %v1359 = vmul.f32 %v1317, 0.01
      %v1360 = vmul.f32 %v1320, 0.01
      %v1361 = vmul.f32 %v1325, 0.01
      %v1362 = vmul.f32 %v1328, 0.01
      %v1363 = vmax.f32 %v1205, %v1331
      %v1364 = vmax.f32 %v1208, %v1332
      %v1365 = vmax.f32 %v1213, %v1333
      %v1366 = vmax.f32 %v1216, %v1334
      %v1367 = vmax.f32 %v1221, %v1335
      %v1368 = vmax.f32 %v1224, %v1336
      %v1369 = vmax.f32 %v1229, %v1337
      %v1370 = vmax.f32 %v1232, %v1338
      %v1371 = vmax.f32 %v1237, %v1339
      %v1372 = vmax.f32 %v1240, %v1340
      %v1373 = vmax.f32 %v1245, %v1341
      %v1374 = vmax.f32 %v1248, %v1342
      %v1375 = vmax.f32 %v1253, %v1343
      %v1376 = vmax.f32 %v1256, %v1344
      %v1377 = vmax.f32 %v1261, %v1345
      %v1378 = vmax.f32 %v1264, %v1346
      %v1379 = vmax.f32 %v1269, %v1347
      %v1380 = vmax.f32 %v1272, %v1348
      %v1381 = vmax.f32 %v1277, %v1349
      %v1382 = vmax.f32 %v1280, %v1350
      %v1383 = vmax.f32 %v1285, %v1351
      %v1384 = vmax.f32 %v1288, %v1352
      %v1385 = vmax.f32 %v1293, %v1353
      %v1386 = vmax.f32 %v1296, %v1354
      %v1387 = vmax.f32 %v1301, %v1355
      %v1388 = vmax.f32 %v1304, %v1356
      %v1389 = vmax.f32 %v1309, %v1357
      %v1390 = vmax.f32 %v1312, %v1358
      %v1391 = vmax.f32 %v1317, %v1359
      %v1392 = vmax.f32 %v1320, %v1360
      %v1393 = vmax.f32 %v1325, %v1361
      %v1394 = vmax.f32 %v1328, %v1362
      %v1395 = vpack.c.bf16 %v1364, %v1363
      %v1396 = vpack.c.bf16 %v1366, %v1365
      %v1397 = vpack.c.bf16 %v1368, %v1367
      %v1398 = vpack.c.bf16 %v1370, %v1369
      %v1399 = vpack.c.bf16 %v1372, %v1371
      %v1400 = vpack.c.bf16 %v1374, %v1373
      %v1401 = vpack.c.bf16 %v1376, %v1375
      %v1402 = vpack.c.bf16 %v1378, %v1377
      %v1403 = vpack.c.bf16 %v1380, %v1379
      %v1404 = vpack.c.bf16 %v1382, %v1381
      %v1405 = vpack.c.bf16 %v1384, %v1383
      %v1406 = vpack.c.bf16 %v1386, %v1385
      %v1407 = vpack.c.bf16 %v1388, %v1387
      %v1408 = vpack.c.bf16 %v1390, %v1389
      %v1409 = vpack.c.bf16 %v1392, %v1391
      %v1410 = vpack.c.bf16 %v1394, %v1393
      %v1411 = vld [vmem:[%s5] sm:$0xf]
      %v1412 = vld [vmem:[%s5 + $0x4] sm:$0xf]
      %v1413 = vld [vmem:[%s5 + $0x8] sm:$0xf]
      %v1414 = vld [vmem:[%s5 + $0xc] sm:$0xf]
      %v1415 = vld [vmem:[%s5 + $0x10] sm:$0xf]
      %v1416 = vld [vmem:[%s5 + $0x14] sm:$0xf]
      %v1417 = vld [vmem:[%s5 + $0x18] sm:$0xf]
      %v1418 = vld [vmem:[%s5 + $0x1c] sm:$0xf]
      %v1419 = vld [vmem:[%s5 + $0x20] sm:$0xf]
      %v1420 = vld [vmem:[%s5 + $0x24] sm:$0xf]
      %v1421 = vld [vmem:[%s5 + $0x28] sm:$0xf]
      %v1422 = vld [vmem:[%s5 + $0x2c] sm:$0xf]
      %v1423 = vld [vmem:[%s5 + $0x30] sm:$0xf]
      %v1424 = vld [vmem:[%s5 + $0x34] sm:$0xf]
      %v1425 = vld [vmem:[%s5 + $0x38] sm:$0xf]
      %v1426 = vld [vmem:[%s5 + $0x3c] sm:$0xf]
      %v1427 = vld [vmem:[%s6] sm:$0x1]
      %v1429 = vlaneseq
      %v1430 = vshrl.u32 %v1429, 7
      %v1431 = vsub.s32 0, %v1430
      %v1432 = vrot.slane %v1427, %v1431
      %v1450 = vunpack.c.l.b16 %v1411
      %v1451 = vunpack.c.l.b16 %v1412
      %v1452 = vunpack.c.l.b16 %v1413
      %v1453 = vunpack.c.l.b16 %v1414
      %v1454 = vunpack.c.l.b16 %v1415
      %v1455 = vunpack.c.l.b16 %v1416
      %v1456 = vunpack.c.l.b16 %v1417
      %v1457 = vunpack.c.l.b16 %v1418
      %v1458 = vunpack.c.l.b16 %v1419
      %v1459 = vunpack.c.l.b16 %v1420
      %v1460 = vunpack.c.l.b16 %v1421
      %v1461 = vunpack.c.l.b16 %v1422
      %v1462 = vunpack.c.l.b16 %v1423
      %v1463 = vunpack.c.l.b16 %v1424
      %v1464 = vunpack.c.l.b16 %v1425
      %v1465 = vunpack.c.l.b16 %v1426
      %v1466 = vpack.c.b16 %v1451, %v1450
      %v1467 = vpack.c.b16 %v1453, %v1452
      %v1468 = vpack.c.b16 %v1455, %v1454
      %v1469 = vpack.c.b16 %v1457, %v1456
      %v1470 = vpack.c.b16 %v1459, %v1458
      %v1471 = vpack.c.b16 %v1461, %v1460
      %v1472 = vpack.c.b16 %v1463, %v1462
      %v1473 = vpack.c.b16 %v1465, %v1464
      %1482 = vmatprep.subr.bf16.mxu0 0
      %1483 = vmatpush1.bf16.msra.mxu0 %v1466
      %1484 = vmatprep.subr.bf16.mxu0 0
      %1485 = vmatpush1.bf16.msra.mxu0 %v1467
      %1486 = vmatprep.subr.bf16.mxu0 0
      %1487 = vmatpush1.bf16.msra.mxu0 %v1468
      %1488 = vmatprep.subr.bf16.mxu0 0
      %1489 = vmatpush1.bf16.msra.mxu0 %v1469
      %1490 = vmatprep.subr.bf16.mxu0 0
      %1491 = vmatpush1.bf16.msra.mxu0 %v1470
      %1492 = vmatprep.subr.bf16.mxu0 0
      %1493 = vmatpush1.bf16.msra.mxu0 %v1471
      %1494 = vmatprep.subr.bf16.mxu0 0
      %1495 = vmatpush1.bf16.msra.mxu0 %v1472
      %1496 = vmatprep.subr.bf16.mxu0 0
      %1497 = vmatpush1.bf16.msra.mxu0 %v1473
      %1498 = vmatprep.subr.bf16.mxu0 0
      %1499 = vmatpush1.bf16.msra.mxu0 0
      %1500 = vmatprep.subr.bf16.mxu0 0
      %1501 = vmatpush1.bf16.msra.mxu0 0
      %1502 = vmatprep.subr.bf16.mxu0 0
      %1503 = vmatpush1.bf16.msra.mxu0 0
      %1504 = vmatprep.subr.bf16.mxu0 0
      %1505 = vmatpush1.bf16.msra.mxu0 0
      %1506 = vmatprep.subr.bf16.mxu0 0
      %1507 = vmatpush1.bf16.msra.mxu0 0
      %1508 = vmatprep.subr.bf16.mxu0 0
      %1509 = vmatpush1.bf16.msra.mxu0 0
      %1510 = vmatprep.subr.bf16.mxu0 0
      %1511 = vmatpush1.bf16.msra.mxu0 0
      %1512 = vmatprep.subr.bf16.mxu0 0
      %1513 = vmatpush1.bf16.msra.mxu0 0
      %1514 = vmatprep.mubr.bf16.mxu0 0
      %1515 = vmatmul.mubr.bf16.gmra.mrb[0].mxu0 %v1395
      %v1516 = vpop.f32.mrb[0].mxu0
      %v1517 = vadd.f32 %v1432, %v1516
      %v1518 = vpop.f32.mrb[0].mxu0
      %v1519 = vpop.f32.mrb[0].mxu0
      %v1520 = vadd.f32 %v1432, %v1519
      %v1521 = vpop.f32.mrb[0].mxu0
      %1522 = vmatprep.mubr.bf16.mxu0 0
      %1523 = vmatmul.mubr.bf16.gmra.mrb[0].mxu0 %v1396
      %v1524 = vpop.f32.mrb[0].mxu0
      %v1525 = vadd.f32 %v1432, %v1524
      %v1526 = vpop.f32.mrb[0].mxu0
      %v1527 = vpop.f32.mrb[0].mxu0
      %v1528 = vadd.f32 %v1432, %v1527
      %v1529 = vpop.f32.mrb[0].mxu0
      %1530 = vmatprep.mubr.bf16.mxu0 0
      %1531 = vmatmul.mubr.bf16.gmra.mrb[0].mxu0 %v1397
      %v1532 = vpop.f32.mrb[0].mxu0
      %v1533 = vadd.f32 %v1432, %v1532
      %v1534 = vpop.f32.mrb[0].mxu0
      %v1535 = vpop.f32.mrb[0].mxu0
      %v1536 = vadd.f32 %v1432, %v1535
      %v1537 = vpop.f32.mrb[0].mxu0
      %1538 = vmatprep.mubr.bf16.mxu0 0
      %1539 = vmatmul.mubr.bf16.gmra.mrb[0].mxu0 %v1398
      %v1540 = vpop.f32.mrb[0].mxu0
      %v1541 = vadd.f32 %v1432, %v1540
      %v1542 = vpop.f32.mrb[0].mxu0
      %v1543 = vpop.f32.mrb[0].mxu0
      %v1544 = vadd.f32 %v1432, %v1543
      %v1545 = vpop.f32.mrb[0].mxu0
      %1546 = vmatprep.mubr.bf16.mxu0 0
      %1547 = vmatmul.mubr.bf16.gmra.mrb[0].mxu0 %v1399
      %v1548 = vpop.f32.mrb[0].mxu0
      %v1549 = vadd.f32 %v1432, %v1548
      %v1550 = vpop.f32.mrb[0].mxu0
      %v1551 = vpop.f32.mrb[0].mxu0
      %v1552 = vadd.f32 %v1432, %v1551
      %v1553 = vpop.f32.mrb[0].mxu0
      %1554 = vmatprep.mubr.bf16.mxu0 0
      %1555 = vmatmul.mubr.bf16.gmra.mrb[0].mxu0 %v1400
      %v1556 = vpop.f32.mrb[0].mxu0
      %v1557 = vadd.f32 %v1432, %v1556
      %v1558 = vpop.f32.mrb[0].mxu0
      %v1559 = vpop.f32.mrb[0].mxu0
      %v1560 = vadd.f32 %v1432, %v1559
      %v1561 = vpop.f32.mrb[0].mxu0
      %1562 = vmatprep.mubr.bf16.mxu0 0
      %1563 = vmatmul.mubr.bf16.gmra.mrb[0].mxu0 %v1401
      %v1564 = vpop.f32.mrb[0].mxu0
      %v1565 = vadd.f32 %v1432, %v1564
      %v1566 = vpop.f32.mrb[0].mxu0
      %v1567 = vpop.f32.mrb[0].mxu0
      %v1568 = vadd.f32 %v1432, %v1567
      %v1569 = vpop.f32.mrb[0].mxu0
      %1570 = vmatprep.mubr.bf16.mxu0 0
      %1571 = vmatmul.mubr.bf16.gmra.mrb[0].mxu0 %v1402
      %v1572 = vpop.f32.mrb[0].mxu0
      %v1573 = vadd.f32 %v1432, %v1572
      %v1574 = vpop.f32.mrb[0].mxu0
      %v1575 = vpop.f32.mrb[0].mxu0
      %v1576 = vadd.f32 %v1432, %v1575
      %v1577 = vpop.f32.mrb[0].mxu0
      %1578 = vmatprep.mubr.bf16.mxu0 0
      %1579 = vmatmul.mubr.bf16.gmra.mrb[0].mxu0 %v1403
      %v1580 = vpop.f32.mrb[0].mxu0
      %v1581 = vadd.f32 %v1432, %v1580
      %v1582 = vpop.f32.mrb[0].mxu0
      %v1583 = vpop.f32.mrb[0].mxu0
      %v1584 = vadd.f32 %v1432, %v1583
      %v1585 = vpop.f32.mrb[0].mxu0
      %1586 = vmatprep.mubr.bf16.mxu0 0
      %1587 = vmatmul.mubr.bf16.gmra.mrb[0].mxu0 %v1404
      %v1588 = vpop.f32.mrb[0].mxu0
      %v1589 = vadd.f32 %v1432, %v1588
      %v1590 = vpop.f32.mrb[0].mxu0
      %v1591 = vpop.f32.mrb[0].mxu0
      %v1592 = vadd.f32 %v1432, %v1591
      %v1593 = vpop.f32.mrb[0].mxu0
      %1594 = vmatprep.mubr.bf16.mxu0 0
      %1595 = vmatmul.mubr.bf16.gmra.mrb[0].mxu0 %v1405
      %v1596 = vpop.f32.mrb[0].mxu0
      %v1597 = vadd.f32 %v1432, %v1596
      %v1598 = vpop.f32.mrb[0].mxu0
      %v1599 = vpop.f32.mrb[0].mxu0
      %v1600 = vadd.f32 %v1432, %v1599
      %v1601 = vpop.f32.mrb[0].mxu0
      %1602 = vmatprep.mubr.bf16.mxu0 0
      %1603 = vmatmul.mubr.bf16.gmra.mrb[0].mxu0 %v1406
      %v1604 = vpop.f32.mrb[0].mxu0
      %v1605 = vadd.f32 %v1432, %v1604
      %v1606 = vpop.f32.mrb[0].mxu0
      %v1607 = vpop.f32.mrb[0].mxu0
      %v1608 = vadd.f32 %v1432, %v1607
      %v1609 = vpop.f32.mrb[0].mxu0
      %1610 = vmatprep.mubr.bf16.mxu0 0
      %1611 = vmatmul.mubr.bf16.gmra.mrb[0].mxu0 %v1407
      %v1612 = vpop.f32.mrb[0].mxu0
      %v1613 = vadd.f32 %v1432, %v1612
      %v1614 = vpop.f32.mrb[0].mxu0
      %v1615 = vpop.f32.mrb[0].mxu0
      %v1616 = vadd.f32 %v1432, %v1615
      %v1617 = vpop.f32.mrb[0].mxu0
      %1618 = vmatprep.mubr.bf16.mxu0 0
      %1619 = vmatmul.mubr.bf16.gmra.mrb[0].mxu0 %v1408
      %v1620 = vpop.f32.mrb[0].mxu0
      %v1621 = vadd.f32 %v1432, %v1620
      %v1622 = vpop.f32.mrb[0].mxu0
      %v1623 = vpop.f32.mrb[0].mxu0
      %v1624 = vadd.f32 %v1432, %v1623
      %v1625 = vpop.f32.mrb[0].mxu0
      %1626 = vmatprep.mubr.bf16.mxu0 0
      %1627 = vmatmul.mubr.bf16.gmra.mrb[0].mxu0 %v1409
      %v1628 = vpop.f32.mrb[0].mxu0
      %v1629 = vadd.f32 %v1432, %v1628
      %v1630 = vpop.f32.mrb[0].mxu0
      %v1631 = vpop.f32.mrb[0].mxu0
      %v1632 = vadd.f32 %v1432, %v1631
      %v1633 = vpop.f32.mrb[0].mxu0
      %1634 = vmatprep.mubr.bf16.mxu0 0
      %1635 = vmatmul.mubr.bf16.gmra.mrb[0].mxu0 %v1410
      %v1636 = vpop.f32.mrb[0].mxu0
      %v1637 = vadd.f32 %v1432, %v1636
      %v1638 = vpop.f32.mrb[0].mxu0
      %v1639 = vpop.f32.mrb[0].mxu0
      %v1640 = vadd.f32 %v1432, %v1639
      %v1641 = vpop.f32.mrb[0].mxu0
      %1642 = vdwg.mxu0
      %vm1643 = vcmask 31744
      %1644 = vst.msk [vmem:[%s283] sm:$0xff] %vm1643, %v1517
      %1645 = vst.msk [vmem:[%s283 + $0x8] sm:$0xff] %vm1643, %v1520
      %1646 = vst.msk [vmem:[%s283 + $0x10] sm:$0xff] %vm1643, %v1525
      %1647 = vst.msk [vmem:[%s283 + $0x18] sm:$0xff] %vm1643, %v1528
      %1648 = vst.msk [vmem:[%s283 + $0x20] sm:$0xff] %vm1643, %v1533
      %1649 = vst.msk [vmem:[%s283 + $0x28] sm:$0xff] %vm1643, %v1536
      %1650 = vst.msk [vmem:[%s283 + $0x30] sm:$0xff] %vm1643, %v1541
      %1651 = vst.msk [vmem:[%s283 + $0x38] sm:$0xff] %vm1643, %v1544
      %1652 = vst.msk [vmem:[%s283 + $0x40] sm:$0xff] %vm1643, %v1549
      %1653 = vst.msk [vmem:[%s283 + $0x48] sm:$0xff] %vm1643, %v1552
      %1654 = vst.msk [vmem:[%s283 + $0x50] sm:$0xff] %vm1643, %v1557
      %1655 = vst.msk [vmem:[%s283 + $0x58] sm:$0xff] %vm1643, %v1560
      %1656 = vst.msk [vmem:[%s283 + $0x60] sm:$0xff] %vm1643, %v1565
      %1657 = vst.msk [vmem:[%s283 + $0x68] sm:$0xff] %vm1643, %v1568
      %1658 = vst.msk [vmem:[%s283 + $0x70] sm:$0xff] %vm1643, %v1573
      %1659 = vst.msk [vmem:[%s283 + $0x78] sm:$0xff] %vm1643, %v1576
      %1660 = vst.msk [vmem:[%s283 + $0x80] sm:$0xff] %vm1643, %v1581
      %1661 = vst.msk [vmem:[%s283 + $0x88] sm:$0xff] %vm1643, %v1584
      %1662 = vst.msk [vmem:[%s283 + $0x90] sm:$0xff] %vm1643, %v1589
      %1663 = vst.msk [vmem:[%s283 + $0x98] sm:$0xff] %vm1643, %v1592
      %1664 = vst.msk [vmem:[%s283 + $0xa0] sm:$0xff] %vm1643, %v1597
      %1665 = vst.msk [vmem:[%s283 + $0xa8] sm:$0xff] %vm1643, %v1600
      %1666 = vst.msk [vmem:[%s283 + $0xb0] sm:$0xff] %vm1643, %v1605
      %1667 = vst.msk [vmem:[%s283 + $0xb8] sm:$0xff] %vm1643, %v1608
      %1668 = vst.msk [vmem:[%s283 + $0xc0] sm:$0xff] %vm1643, %v1613
      %1669 = vst.msk [vmem:[%s283 + $0xc8] sm:$0xff] %vm1643, %v1616
      %1670 = vst.msk [vmem:[%s283 + $0xd0] sm:$0xff] %vm1643, %v1621
      %1671 = vst.msk [vmem:[%s283 + $0xd8] sm:$0xff] %vm1643, %v1624
      %1672 = vst.msk [vmem:[%s283 + $0xe0] sm:$0xff] %vm1643, %v1629
      %1673 = vst.msk [vmem:[%s283 + $0xe8] sm:$0xff] %vm1643, %v1632
      %1674 = vst.msk [vmem:[%s283 + $0xf0] sm:$0xff] %vm1643, %v1637
      %1675 = vst.msk [vmem:[%s283 + $0xf8] sm:$0xff] %vm1643, %v1640
      %s1676 = smul.u32 32, %s18
      %p1677 = scmp.lt.s32.totalorder %s1676, 127
      %s1678 = scalar_select %p1677, %s1676, 127
      %s1679 = smul.addr %s1678, 8
      %s1680 = scalar_lea.vmem %s7, %s1679
      // Predicated region
      $region49: #{mlp_querynet_forward.1} parent=47 // pred_check
        %p1681 = pneg %p188
      $region50: #{mlp_querynet_forward.1} parent=47 // pred_check_branch
        %1683 = sbr.rel (%p1681) target = $region52
      $region51: #{mlp_querynet_forward.1} parent=47 // pred_region
        %s1684 = smul.u32 32, %s18
      $region52: #{mlp_querynet_forward.1} parent=47 // pred_fallthru
        _
    $region48: #{mlp_querynet_forward.1} parent=5 // pred_fallthru
      _
    %p1685 = scmp.le.s32.totalorder 2, %s13
    // Predicated region
    $region53: #{mlp_querynet_forward.1} parent=5 // pred_check
      %p1686 = pneg %p1685
    $region54: #{mlp_querynet_forward.1} parent=5 // pred_check_branch
      %1688 = sbr.rel (%p1686) target = $region56
    $region55: #{mlp_querynet_forward.1} parent=5 // pred_region
      %s1689 = ssub.s32 %s13, 2
      // Predicated region
      $region57: #{mlp_querynet_forward.1} parent=55 // pred_check
        %p1690 = pneg %p194
      $region58: #{mlp_querynet_forward.1} parent=55 // pred_check_branch
        %1692 = sbr.rel (%p1690) target = $region60
      $region59: #{mlp_querynet_forward.1} parent=55 // pred_region
        %s1693 = smul.u32 32, %s19
        %p1694 = scmp.lt.s32.totalorder %s1693, 127
        %s1695 = scalar_select %p1694, %s1693, 127
        %s1696 = smul.addr %s1695, 8
        %s1697 = scalar_lea.vmem %s7, %s1696
      $region60: #{mlp_querynet_forward.1} parent=55 // pred_fallthru
        _
    $region56: #{mlp_querynet_forward.1} parent=5 // pred_fallthru
      _
  $region6: #{mlp_querynet_forward.1} parent=0 // loop_footer
    %s17 = sadd.s32 1, %s13
  $region7: #{mlp_querynet_forward.1} parent=0 // loop_footer_branch
    %12 = sbr.rel target = $region3
  $region8: #{mlp_querynet_forward.1} parent=0 // loop_exit
    _

</llo_original>
